<compile_context>
chip_gen: v7x
topology: tpu7x:2x2x1
jax: 0.10.0
libtpu: 0.0.40
codegen_flags: <defaults>
</compile_context>

<pallas_src>
import functools
import math

import jax
import jax.numpy as jnp
from jax.experimental import pallas as pl
from jax.experimental.pallas import tpu as pltpu


def _round_up(x, m):
    return ((x + m - 1) // m) * m


def _choose_tn(n, tn_max):
    """Pick the per-step batch tile TN (multiple of 8).

    * tiny N        -> one tile (nothing to split)
    * medium N      -> >=2 roughly-equal tiles (v7x: both TCs get work),
                       padding waste < 8 * n_steps rows
    * large N       -> full tn_max tiles, many steps
    """
    n8 = _round_up(max(n, 1), 8)
    if n8 <= 16:
        return n8
    if n8 >= 2 * tn_max:
        return tn_max
    steps = max(2, -(-n8 // tn_max))
    return _round_up(-(-n8 // steps), 8)


def _co_attention_kernel(a_ref, b_ref,
                         wa_ref, ba_ref, wb_ref, bb_ref, ww_ref, bw_ref,
                         out_ref, *, la, lb):
    rows_a, _ = a_ref.shape
    tn = rows_a // la
    d = wa_ref.shape[1]

    # linear_a / linear_b (+ ReLU): bf16 operands, f32 accumulation on the MXU.
    ha = jnp.dot(a_ref[...], wa_ref[...],
                 preferred_element_type=jnp.float32) + ba_ref[...]
    ha = jnp.maximum(ha, 0.0)                               # (tn*la, d) f32
    hb = jnp.dot(b_ref[...], wb_ref[...],
                 preferred_element_type=jnp.float32) + bb_ref[...]
    hb = jnp.maximum(hb, 0.0)                               # (tn*lb, d) f32

    # zz = W(relu(linear_a(a)))
    zz = jnp.dot(ha.astype(ww_ref.dtype), ww_ref[...],
                 preferred_element_type=jnp.float32) + bw_ref[...]   # (tn*la, d)

    # Per-sample 3-D views.  With la/lb multiples of 8 these reshapes are
    # tile-exact (no data movement); other lengths are still correct but may
    # relayout.
    ha3 = ha.reshape(tn, la, d)
    hb3 = hb.reshape(tn, lb, d)
    zz3 = zz.reshape(tn, la, d)

    # z = zz @ hb^T is never materialized; by linearity of the mean:
    #   mean(z, over la)[n, j] = mean_rows(zz)[n] . hb[n, j]
    #   mean(z, over lb)[n, i] = zz[n, i] . mean_rows(hb)[n]
    mean_zz = jnp.mean(zz3, axis=1)                         # (tn, d)
    mean_hb = jnp.mean(hb3, axis=1)                         # (tn, d)

    att_row_raw = jnp.sum(mean_zz[:, None, :] * hb3, axis=-1)   # (tn, lb)
    att_col_raw = jnp.sum(zz3 * mean_hb[:, None, :], axis=-1)   # (tn, la)

    att_row = jax.nn.sigmoid(att_row_raw)
    att_col = jax.nn.sigmoid(att_col_raw)

    def _softmax(x):
        # Exact divide so returned attention weights sum to 1 exactly.
        x = x - jnp.max(x, axis=-1, keepdims=True)
        e = jnp.exp(x)
        return e / jnp.sum(e, axis=-1, keepdims=True)

    att_row = _softmax(att_row)                             # (tn, lb)
    att_col = _softmax(att_col)                             # (tn, la)

    # TODO(synk): nn.Dropout(self.dropout) skipped (inference / p=None is identity).
    fa = jnp.sum(att_col[:, :, None] * ha3, axis=1)         # (tn, d)
    fb = jnp.sum(att_row[:, :, None] * hb3, axis=1)         # (tn, d)

    # Single packed, lane-dense output slab: [ fa | fb | att_col | att_row | 0 ].
    # (Individual stores are masked within the 128-lane tile, but the output
    # block / writeback DMA is one dense (TN, 128k) slab instead of 4 thin ones.)
    used = 2 * d + la + lb
    width = out_ref.shape[1]
    out_ref[:, 0:d] = fa
    out_ref[:, d:2 * d] = fb
    out_ref[:, 2 * d:2 * d + la] = att_col
    out_ref[:, 2 * d + la:used] = att_row
    if width > used:
        out_ref[:, used:width] = jnp.zeros((tn, width - used), jnp.float32)


def co_attention_forward(input_a, input_b, params, *, tn_max=512):
    """input_a: (B, S, La, E), input_b: (B, S, Lb, E).

    Returns (final_a (B,S,D), final_b (B,S,D), _a1 (B*S, La), _a2 (B*S, Lb))."""
    B, S, La, E = input_a.shape
    _, _, Lb, _ = input_b.shape
    N = B * S
    D = params["wa_t"].shape[1]

    # bf16 MXU operands (f32 accumulation in-kernel); biases stay f32.
    a = input_a.reshape(N * La, E).astype(jnp.bfloat16)
    b = input_b.reshape(N * Lb, E).astype(jnp.bfloat16)
    wa_t = params["wa_t"].astype(jnp.bfloat16)     # (E, D)
    wb_t = params["wb_t"].astype(jnp.bfloat16)     # (E, D)
    ww_t = params["ww_t"].astype(jnp.bfloat16)     # (D, D)
    ba = params["ba"].reshape(1, D).astype(jnp.float32)
    bb = params["bb"].reshape(1, D).astype(jnp.float32)
    bw = params["bw"].reshape(1, D).astype(jnp.float32)

    # Batch tiling: TN samples per grid step, <= 1 small tile of padding waste.
    TN = _choose_tn(N, tn_max)
    N_pad = _round_up(N, TN)
    if N_pad != N:
        a = jnp.pad(a, ((0, (N_pad - N) * La), (0, 0)))
        b = jnp.pad(b, ((0, (N_pad - N) * Lb), (0, 0)))
    grid = (N_pad // TN,)

    # Packed output layout: [fa (D) | fb (D) | a1 (La) | a2 (Lb) | zero pad].
    C = 2 * D + La + Lb
    C_pad = _round_up(C, 128)

    weight_spec = lambda shape: pl.BlockSpec(shape, lambda n: (0, 0))

    out = pl.pallas_call(
        functools.partial(_co_attention_kernel, la=La, lb=Lb),
        grid=grid,
        in_specs=[
            pl.BlockSpec((TN * La, E), lambda n: (n, 0)),
            pl.BlockSpec((TN * Lb, E), lambda n: (n, 0)),
            weight_spec((E, D)), weight_spec((1, D)),
            weight_spec((E, D)), weight_spec((1, D)),
            weight_spec((D, D)), weight_spec((1, D)),
        ],
        out_specs=pl.BlockSpec((TN, C_pad), lambda n: (n, 0)),
        out_shape=jax.ShapeDtypeStruct((N_pad, C_pad), jnp.float32),
        compiler_params=pltpu.CompilerParams(
            dimension_semantics=("parallel",),
            # 32 MiB scoped VMEM is ample for TN<=512 here and safe on v7x's
            # 64 MiB physical VMEM as well as v5e/v6e's 128 MiB.
            vmem_limit_bytes=32 * 1024 * 1024,
        ),
    )(a, b, wa_t, ba, wb_t, bb, ww_t, bw)

    final_a = out[:N, 0:D].reshape(B, S, D)
    final_b = out[:N, D:2 * D].reshape(B, S, D)
    _a1 = out[:N, 2 * D:2 * D + La]
    _a2 = out[:N, 2 * D + La:2 * D + La + Lb]
    return final_a, final_b, _a1, _a2


def init_params(key, emb_size, output_size):
    """Deterministic init matching nn.Linear + xavier_uniform_ on weights."""
    def xavier(k, out_f, in_f):
        bound = math.sqrt(6.0 / (in_f + out_f))
        return jax.random.uniform(k, (out_f, in_f), jnp.float32, -bound, bound)

    def bias(k, out_f, in_f):
        bound = 1.0 / math.sqrt(in_f)
        return jax.random.uniform(k, (out_f,), jnp.float32, -bound, bound)

    ks = jax.random.split(key, 6)
    wa = xavier(ks[0], output_size, emb_size)   # (D, E)
    wb = xavier(ks[1], output_size, emb_size)
    ww = xavier(ks[2], output_size, output_size)
    ba = bias(ks[3], output_size, emb_size)
    bb = bias(ks[4], output_size, emb_size)
    bw = bias(ks[5], output_size, output_size)
    return {
        "wa_t": wa.T,   # (E, D) for x @ W
        "wb_t": wb.T,
        "ww_t": ww.T,
        "ba": ba, "bb": bb, "bw": bw,
    }


def _reference(input_a, input_b, params):
    """Pure-JAX reference with the same bf16-operand / f32-accumulation
    precision as the kernel (module math, original z-materializing form)."""
    B, S, La, E = input_a.shape
    Lb = input_b.shape[2]
    N = B * S
    a = input_a.reshape(N, La, E).astype(jnp.bfloat16)
    b = input_b.reshape(N, Lb, E).astype(jnp.bfloat16)
    wa = params["wa_t"].astype(jnp.bfloat16)
    wb = params["wb_t"].astype(jnp.bfloat16)
    ww = params["ww_t"].astype(jnp.bfloat16)
    D = params["wa_t"].shape[1]

    ha = jax.nn.relu(jnp.einsum("nle,ed->nld", a, wa,
                                preferred_element_type=jnp.float32) + params["ba"])
    hb = jax.nn.relu(jnp.einsum("nle,ed->nld", b, wb,
                                preferred_element_type=jnp.float32) + params["bb"])
    zz = jnp.einsum("nld,de->nle", ha.astype(jnp.bfloat16), ww,
                    preferred_element_type=jnp.float32) + params["bw"]
    z = jnp.einsum("nld,nmd->nlm", zz, hb)                      # (N, La, Lb) f32
    att_row = jax.nn.softmax(jax.nn.sigmoid(jnp.mean(z, axis=1)), axis=-1)  # (N, Lb)
    att_col = jax.nn.softmax(jax.nn.sigmoid(jnp.mean(z, axis=2)), axis=-1)  # (N, La)
    fa = jnp.sum(att_col[:, :, None] * ha, axis=1)
    fb = jnp.sum(att_row[:, :, None] * hb, axis=1)
    return fa.reshape(B, S, D), fb.reshape(B, S, D), att_col, att_row


if __name__ == "__main__":
    # Small shapes consistent with the module; N = B*S = 24 exercises the
    # multi-step grid (TN=16, 2 steps) and the padded-remainder path.
    B, S, La, Lb, E, D = 2, 12, 8, 8, 32, 32
    key = jax.random.PRNGKey(0)
    k_a, k_b, k_p = jax.random.split(key, 3)

    input_a = jax.random.normal(k_a, (B, S, La, E), jnp.float32)
    input_b = jax.random.normal(k_b, (B, S, Lb, E), jnp.float32)
    params = init_params(k_p, emb_size=E, output_size=D)

    outs = co_attention_forward(input_a, input_b, params)
    outs = jax.block_until_ready(outs)

    refs = _reference(input_a, input_b, params)
    # Tolerance covers MXU accumulation-order differences, bf16 operands and
    # the (exact) linear-mean rewrite.
    for o, r in zip(outs, refs):
        assert o.shape == r.shape, (o.shape, r.shape)
        assert jnp.allclose(o, r, atol=2e-2, rtol=2e-2), float(jnp.max(jnp.abs(o - r)))

    print("KERNEL_OK")
</pallas_src>

<mosaic_0001>
module attributes {stable_mosaic.version = 11 : i64} {
  func.func @_co_attention_kernel(%arg0: i32, %arg1: memref<128x32xbf16, #tpu.memory_space<vmem>>, %arg2: memref<128x32xbf16, #tpu.memory_space<vmem>>, %arg3: memref<32x32xbf16, #tpu.memory_space<vmem>>, %arg4: memref<1x32xf32, #tpu.memory_space<vmem>>, %arg5: memref<32x32xbf16, #tpu.memory_space<vmem>>, %arg6: memref<1x32xf32, #tpu.memory_space<vmem>>, %arg7: memref<32x32xbf16, #tpu.memory_space<vmem>>, %arg8: memref<1x32xf32, #tpu.memory_space<vmem>>, %arg9: memref<16x128xf32, #tpu.memory_space<vmem>>) attributes {dimension_semantics = [#tpu.dimension_semantics<parallel>], iteration_bounds = array<i64: 2>, scalar_prefetch = 0 : i64, scratch_operands = 0 : i64, tpu.core_type = #tpu.core_type<tc>, window_params = [{transform_indices = @transform_0, window_bounds = array<i64: 128, 32>}, {transform_indices = @transform_1, window_bounds = array<i64: 128, 32>}, {pipeline_mode = #tpu.pipeline_mode<synchronous>, transform_indices = @transform_2, window_bounds = array<i64: 32, 32>}, {pipeline_mode = #tpu.pipeline_mode<synchronous>, transform_indices = @transform_3, window_bounds = array<i64: 1, 32>}, {pipeline_mode = #tpu.pipeline_mode<synchronous>, transform_indices = @transform_4, window_bounds = array<i64: 32, 32>}, {pipeline_mode = #tpu.pipeline_mode<synchronous>, transform_indices = @transform_5, window_bounds = array<i64: 1, 32>}, {pipeline_mode = #tpu.pipeline_mode<synchronous>, transform_indices = @transform_6, window_bounds = array<i64: 32, 32>}, {pipeline_mode = #tpu.pipeline_mode<synchronous>, transform_indices = @transform_7, window_bounds = array<i64: 1, 32>}, {transform_indices = @transform_8, window_bounds = array<i64: 16, 128>}]} {
    %c0 = arith.constant 0 : index
    %c0_0 = arith.constant 0 : index
    %0 = vector.load %arg1[%c0, %c0_0] : memref<128x32xbf16, #tpu.memory_space<vmem>>, vector<128x32xbf16>
    %c0_1 = arith.constant 0 : index
    %c0_2 = arith.constant 0 : index
    %1 = vector.load %arg3[%c0_1, %c0_2] : memref<32x32xbf16, #tpu.memory_space<vmem>>, vector<32x32xbf16>
    %cst = arith.constant dense<0.000000e+00> : vector<128x32xf32>
    %2 = tpu.matmul %0, %1, %cst {dimension_numbers = #tpu.dot_dimension_numbers<[1], [0], [0], [1], [0, 0, 1, 1], [], []>} : vector<128x32xbf16>, vector<32x32xbf16>, vector<128x32xf32> -> vector<128x32xf32>
    %c0_3 = arith.constant 0 : index
    %c0_4 = arith.constant 0 : index
    %3 = vector.load %arg4[%c0_3, %c0_4] : memref<1x32xf32, #tpu.memory_space<vmem>>, vector<1x32xf32>
    %4 = vector.broadcast %3 : vector<1x32xf32> to vector<128x32xf32>
    %5 = arith.addf %2, %4 : vector<128x32xf32>
    %cst_5 = arith.constant 0.000000e+00 : f32
    %6 = vector.broadcast %cst_5 : f32 to vector<128x32xf32>
    %7 = arith.maximumf %5, %6 : vector<128x32xf32>
    %c0_6 = arith.constant 0 : index
    %c0_7 = arith.constant 0 : index
    %8 = vector.load %arg2[%c0_6, %c0_7] : memref<128x32xbf16, #tpu.memory_space<vmem>>, vector<128x32xbf16>
    %c0_8 = arith.constant 0 : index
    %c0_9 = arith.constant 0 : index
    %9 = vector.load %arg5[%c0_8, %c0_9] : memref<32x32xbf16, #tpu.memory_space<vmem>>, vector<32x32xbf16>
    %cst_10 = arith.constant dense<0.000000e+00> : vector<128x32xf32>
    %10 = tpu.matmul %8, %9, %cst_10 {dimension_numbers = #tpu.dot_dimension_numbers<[1], [0], [0], [1], [0, 0, 1, 1], [], []>} : vector<128x32xbf16>, vector<32x32xbf16>, vector<128x32xf32> -> vector<128x32xf32>
    %c0_11 = arith.constant 0 : index
    %c0_12 = arith.constant 0 : index
    %11 = vector.load %arg6[%c0_11, %c0_12] : memref<1x32xf32, #tpu.memory_space<vmem>>, vector<1x32xf32>
    %12 = vector.broadcast %11 : vector<1x32xf32> to vector<128x32xf32>
    %13 = arith.addf %10, %12 : vector<128x32xf32>
    %cst_13 = arith.constant 0.000000e+00 : f32
    %14 = vector.broadcast %cst_13 : f32 to vector<128x32xf32>
    %15 = arith.maximumf %13, %14 : vector<128x32xf32>
    %16 = arith.truncf %7 : vector<128x32xf32> to vector<128x32xbf16>
    %c0_14 = arith.constant 0 : index
    %c0_15 = arith.constant 0 : index
    %17 = vector.load %arg7[%c0_14, %c0_15] : memref<32x32xbf16, #tpu.memory_space<vmem>>, vector<32x32xbf16>
    %cst_16 = arith.constant dense<0.000000e+00> : vector<128x32xf32>
    %18 = tpu.matmul %16, %17, %cst_16 {dimension_numbers = #tpu.dot_dimension_numbers<[1], [0], [0], [1], [0, 0, 1, 1], [], []>} : vector<128x32xbf16>, vector<32x32xbf16>, vector<128x32xf32> -> vector<128x32xf32>
    %c0_17 = arith.constant 0 : index
    %c0_18 = arith.constant 0 : index
    %19 = vector.load %arg8[%c0_17, %c0_18] : memref<1x32xf32, #tpu.memory_space<vmem>>, vector<1x32xf32>
    %20 = vector.broadcast %19 : vector<1x32xf32> to vector<128x32xf32>
    %21 = arith.addf %18, %20 : vector<128x32xf32>
    %22 = vector.shape_cast %7 : vector<128x32xf32> to vector<16x8x32xf32>
    %23 = vector.shape_cast %15 : vector<128x32xf32> to vector<16x8x32xf32>
    %24 = vector.shape_cast %21 : vector<128x32xf32> to vector<16x8x32xf32>
    %cst_19 = arith.constant dense<0.000000e+00> : vector<16x32xf32>
    %25 = vector.multi_reduction <add>, %24, %cst_19 [1] : vector<16x8x32xf32> to vector<16x32xf32>
    %cst_20 = arith.constant 8.000000e+00 : f32
    %26 = vector.broadcast %cst_20 : f32 to vector<16x32xf32>
    %27 = arith.divf %25, %26 : vector<16x32xf32>
    %cst_21 = arith.constant dense<0.000000e+00> : vector<16x32xf32>
    %28 = vector.multi_reduction <add>, %23, %cst_21 [1] : vector<16x8x32xf32> to vector<16x32xf32>
    %cst_22 = arith.constant 8.000000e+00 : f32
    %29 = vector.broadcast %cst_22 : f32 to vector<16x32xf32>
    %30 = arith.divf %28, %29 : vector<16x32xf32>
    %31 = vector.shape_cast %27 : vector<16x32xf32> to vector<16x1x32xf32>
    %32 = vector.broadcast %31 : vector<16x1x32xf32> to vector<16x8x32xf32>
    %33 = arith.mulf %32, %23 : vector<16x8x32xf32>
    %cst_23 = arith.constant dense<0.000000e+00> : vector<16x8xf32>
    %34 = vector.multi_reduction <add>, %33, %cst_23 [2] : vector<16x8x32xf32> to vector<16x8xf32>
    %35 = vector.shape_cast %30 : vector<16x32xf32> to vector<16x1x32xf32>
    %36 = vector.broadcast %35 : vector<16x1x32xf32> to vector<16x8x32xf32>
    %37 = arith.mulf %24, %36 : vector<16x8x32xf32>
    %cst_24 = arith.constant dense<0.000000e+00> : vector<16x8xf32>
    %38 = vector.multi_reduction <add>, %37, %cst_24 [2] : vector<16x8x32xf32> to vector<16x8xf32>
    %39 = arith.negf %34 : vector<16x8xf32>
    %40 = math.exp %39 : vector<16x8xf32>
    %cst_25 = arith.constant 1.000000e+00 : f32
    %41 = vector.broadcast %cst_25 : f32 to vector<16x8xf32>
    %42 = arith.addf %41, %40 : vector<16x8xf32>
    %43 = arith.divf %41, %42 : vector<16x8xf32>
    %44 = arith.negf %38 : vector<16x8xf32>
    %45 = math.exp %44 : vector<16x8xf32>
    %cst_26 = arith.constant 1.000000e+00 : f32
    %46 = vector.broadcast %cst_26 : f32 to vector<16x8xf32>
    %47 = arith.addf %46, %45 : vector<16x8xf32>
    %48 = arith.divf %46, %47 : vector<16x8xf32>
    %cst_27 = arith.constant dense<0xFF800000> : vector<16xf32>
    %49 = vector.multi_reduction <maximumf>, %43, %cst_27 [1] : vector<16x8xf32> to vector<16xf32>
    %50 = vector.shape_cast %49 : vector<16xf32> to vector<16x1xf32>
    %51 = vector.broadcast %50 : vector<16x1xf32> to vector<16x8xf32>
    %52 = arith.subf %43, %51 : vector<16x8xf32>
    %53 = math.exp %52 : vector<16x8xf32>
    %cst_28 = arith.constant dense<0.000000e+00> : vector<16xf32>
    %54 = vector.multi_reduction <add>, %53, %cst_28 [1] : vector<16x8xf32> to vector<16xf32>
    %55 = vector.shape_cast %54 : vector<16xf32> to vector<16x1xf32>
    %56 = vector.broadcast %55 : vector<16x1xf32> to vector<16x8xf32>
    %57 = arith.divf %53, %56 : vector<16x8xf32>
    %cst_29 = arith.constant dense<0xFF800000> : vector<16xf32>
    %58 = vector.multi_reduction <maximumf>, %48, %cst_29 [1] : vector<16x8xf32> to vector<16xf32>
    %59 = vector.shape_cast %58 : vector<16xf32> to vector<16x1xf32>
    %60 = vector.broadcast %59 : vector<16x1xf32> to vector<16x8xf32>
    %61 = arith.subf %48, %60 : vector<16x8xf32>
    %62 = math.exp %61 : vector<16x8xf32>
    %cst_30 = arith.constant dense<0.000000e+00> : vector<16xf32>
    %63 = vector.multi_reduction <add>, %62, %cst_30 [1] : vector<16x8xf32> to vector<16xf32>
    %64 = vector.shape_cast %63 : vector<16xf32> to vector<16x1xf32>
    %65 = vector.broadcast %64 : vector<16x1xf32> to vector<16x8xf32>
    %66 = arith.divf %62, %65 : vector<16x8xf32>
    %67 = vector.shape_cast %66 : vector<16x8xf32> to vector<16x8x1xf32>
    %68 = vector.broadcast %67 : vector<16x8x1xf32> to vector<16x8x32xf32>
    %69 = arith.mulf %68, %22 : vector<16x8x32xf32>
    %cst_31 = arith.constant dense<0.000000e+00> : vector<16x32xf32>
    %70 = vector.multi_reduction <add>, %69, %cst_31 [1] : vector<16x8x32xf32> to vector<16x32xf32>
    %71 = vector.shape_cast %57 : vector<16x8xf32> to vector<16x8x1xf32>
    %72 = vector.broadcast %71 : vector<16x8x1xf32> to vector<16x8x32xf32>
    %73 = arith.mulf %72, %23 : vector<16x8x32xf32>
    %cst_32 = arith.constant dense<0.000000e+00> : vector<16x32xf32>
    %74 = vector.multi_reduction <add>, %73, %cst_32 [1] : vector<16x8x32xf32> to vector<16x32xf32>
    %c0_33 = arith.constant 0 : index
    %c0_34 = arith.constant 0 : index
    %75 = vector.load %arg9[%c0_33, %c0_34] : memref<16x128xf32, #tpu.memory_space<vmem>>, vector<16x32xf32>
    tpu.vector_store %arg9[%c0_33, %c0_34], %70 {strides = array<i32>} : memref<16x128xf32, #tpu.memory_space<vmem>>, vector<16x32xf32>,
    %c0_35 = arith.constant 0 : index
    %c32 = arith.constant 32 : index
    %76 = vector.load %arg9[%c0_35, %c32] : memref<16x128xf32, #tpu.memory_space<vmem>>, vector<16x32xf32>
    tpu.vector_store %arg9[%c0_35, %c32], %74 {strides = array<i32>} : memref<16x128xf32, #tpu.memory_space<vmem>>, vector<16x32xf32>,
    %c0_36 = arith.constant 0 : index
    %c64 = arith.constant 64 : index
    %77 = vector.load %arg9[%c0_36, %c64] : memref<16x128xf32, #tpu.memory_space<vmem>>, vector<16x8xf32>
    tpu.vector_store %arg9[%c0_36, %c64], %66 {strides = array<i32>} : memref<16x128xf32, #tpu.memory_space<vmem>>, vector<16x8xf32>,
    %c0_37 = arith.constant 0 : index
    %c72 = arith.constant 72 : index
    %78 = vector.load %arg9[%c0_37, %c72] : memref<16x128xf32, #tpu.memory_space<vmem>>, vector<16x8xf32>
    tpu.vector_store %arg9[%c0_37, %c72], %57 {strides = array<i32>} : memref<16x128xf32, #tpu.memory_space<vmem>>, vector<16x8xf32>,
    %cst_38 = arith.constant 0.000000e+00 : f32
    %79 = vector.broadcast %cst_38 : f32 to vector<16x48xf32>
    %c0_39 = arith.constant 0 : index
    %c80 = arith.constant 80 : index
    %80 = vector.load %arg9[%c0_39, %c80] : memref<16x128xf32, #tpu.memory_space<vmem>>, vector<16x48xf32>
    tpu.vector_store %arg9[%c0_39, %c80], %79 {strides = array<i32>} : memref<16x128xf32, #tpu.memory_space<vmem>>, vector<16x48xf32>,
    return
  }
  func.func @transform_0(%arg0: i32) -> (i32, i32) {
    %c0_i32 = arith.constant 0 : i32
    %c0_i32_0 = arith.constant 0 : i32
    return %arg0, %c0_i32 : i32, i32
  }
  func.func @transform_1(%arg0: i32) -> (i32, i32) {
    %c0_i32 = arith.constant 0 : i32
    %c0_i32_0 = arith.constant 0 : i32
    return %arg0, %c0_i32 : i32, i32
  }
  func.func @transform_2(%arg0: i32) -> (i32, i32) {
    %c0_i32 = arith.constant 0 : i32
    %c0_i32_0 = arith.constant 0 : i32
    %c0_i32_1 = arith.constant 0 : i32
    return %c0_i32, %c0_i32_0 : i32, i32
  }
  func.func @transform_3(%arg0: i32) -> (i32, i32) {
    %c0_i32 = arith.constant 0 : i32
    %c0_i32_0 = arith.constant 0 : i32
    %c0_i32_1 = arith.constant 0 : i32
    return %c0_i32, %c0_i32_0 : i32, i32
  }
  func.func @transform_4(%arg0: i32) -> (i32, i32) {
    %c0_i32 = arith.constant 0 : i32
    %c0_i32_0 = arith.constant 0 : i32
    %c0_i32_1 = arith.constant 0 : i32
    return %c0_i32, %c0_i32_0 : i32, i32
  }
  func.func @transform_5(%arg0: i32) -> (i32, i32) {
    %c0_i32 = arith.constant 0 : i32
    %c0_i32_0 = arith.constant 0 : i32
    %c0_i32_1 = arith.constant 0 : i32
    return %c0_i32, %c0_i32_0 : i32, i32
  }
  func.func @transform_6(%arg0: i32) -> (i32, i32) {
    %c0_i32 = arith.constant 0 : i32
    %c0_i32_0 = arith.constant 0 : i32
    %c0_i32_1 = arith.constant 0 : i32
    return %c0_i32, %c0_i32_0 : i32, i32
  }
  func.func @transform_7(%arg0: i32) -> (i32, i32) {
    %c0_i32 = arith.constant 0 : i32
    %c0_i32_0 = arith.constant 0 : i32
    %c0_i32_1 = arith.constant 0 : i32
    return %c0_i32, %c0_i32_0 : i32, i32
  }
  func.func @transform_8(%arg0: i32) -> (i32, i32) {
    %c0_i32 = arith.constant 0 : i32
    %c0_i32_0 = arith.constant 0 : i32
    return %arg0, %c0_i32 : i32, i32
  }
}

</mosaic_0001>

<llo_original>
// kernel: tpu_custom_call.1
$region0: #{tpu_custom_call.1}
  #allocation0 [shape = 'u32[]', space=smem, size = 0x4, offset = 0x4, fixed_abs, tag = 'smem constant byte address 0x4 - core index']
  #allocation1 [shape = 'u32[144,128]{1,0:T(1,128)}', space=vmem, size = 0x12000, scoped, tag = 'internal scratch']
  %s0 = inlined_call_operand.vmem [shape: bf16[256,32], index: 0, kind: input, shape index: {}]
  %s1 = inlined_call_operand.vmem [shape: bf16[256,32], index: 1, kind: input, shape index: {}]
  %s2 = inlined_call_operand.vmem [shape: bf16[32,32], index: 2, kind: input, shape index: {}]
  %s3 = inlined_call_operand.vmem [shape: f32[1,32], index: 3, kind: input, shape index: {}]
  %s4 = inlined_call_operand.vmem [shape: bf16[32,32], index: 4, kind: input, shape index: {}]
  %s5 = inlined_call_operand.vmem [shape: f32[1,32], index: 5, kind: input, shape index: {}]
  %s6 = inlined_call_operand.vmem [shape: bf16[32,32], index: 6, kind: input, shape index: {}]
  %s7 = inlined_call_operand.vmem [shape: f32[1,32], index: 7, kind: input, shape index: {}]
  %s8 = inlined_call_operand.hbm [shape: f32[32,128], index: 8, kind: output, shape index: {}]
  %s9 = sld [smem:[#allocation0]]
  $region65: #{tpu_custom_call.1} parent=0
    _
  %s11 = ssub.s32 1, %s9
  %s12 = scalar_select 0, %s11, %s9
  $region1: #{tpu_custom_call.1} parent=0
    #allocation2 [shape = 'u8[16384]{0}', space=vmem, size = 0x4000, scoped, tag = 'output window, operand 0']
    #allocation3 [shape = 's32[2]{0}', space=sflag, size = 0x8, scoped, tag = 'scoped memory for tpu_custom_call.1']
    %13 = vsyncpa [#allocation3], 0
    %s14 = scalar_lea.sflag [#allocation3], 1
    %15 = vsyncpa %s14, 0
    loop: start=0, step=1, limit=4
    $region2: #{tpu_custom_call.1} parent=1 // loop_pre_header
      _
    $region3: #{tpu_custom_call.1} parent=1 // loop_header
      %s17 = sphi 0, %s21
      %p18 = scmp.ge.s32.totalorder %s17, 4
      %s27 = sphi 0, %s29
      %s30 = sphi 0, %s27
      %s31 = sphi 0, %s30
      %s47 = sphi 0, %s31
      %s53 = sphi 0, %s55
      %s56 = sphi 0, %s53
      %s57 = sphi 0, %s56
      %s73 = sphi 0, %s57
      %s77 = sphi 0, %s77
      %s79 = sphi 0, %s77
      %s80 = sphi 0, %s79
      %s94 = sphi 0, %s80
      %s98 = sphi 0, %s98
      %s100 = sphi 0, %s98
      %s101 = sphi 0, %s100
      %s115 = sphi 0, %s101
      %s119 = sphi 0, %s119
      %s121 = sphi 0, %s119
      %s122 = sphi 0, %s121
      %s136 = sphi 0, %s122
      %s140 = sphi 0, %s140
      %s142 = sphi 0, %s140
      %s143 = sphi 0, %s142
      %s157 = sphi 0, %s143
      %s161 = sphi 0, %s161
      %s163 = sphi 0, %s161
      %s164 = sphi 0, %s163
      %s178 = sphi 0, %s164
      %s182 = sphi 0, %s182
      %s184 = sphi 0, %s182
      %s185 = sphi 0, %s184
      %s199 = sphi 0, %s185
      %s205 = sphi 0, %s207
      %s208 = sphi 0, %s205
      %s209 = sphi 0, %s208
      %s225 = sphi 0, %s209
    $region4: #{tpu_custom_call.1} parent=1 // loop_header_branch
      %20 = sbr.rel (%p18) target = $region8
    $region5: #{tpu_custom_call.1} parent=1 // loop_body
      %s22 = ssub.s32 %s17, 1
      %s23 = ssub.s32 %s17, 2
      %s24 = sadd.s32 %s17, 1
      %s25 = ssub.s32 %s17, %s24
      %p26 = scmp.eq.s32.totalorder %s25, 0
      %s28 = sadd.s32 %s27, 1
      %s29 = scalar_select %p26, %s27, %s28
      %p32 = pneg %p26
      %p33 = scmp.eq.s32.totalorder %s17, 1
      %p34 = por %p32, %p33
      %p35 = scmp.ne.s32.totalorder %s27, %s30
      %p36 = scmp.eq.s32.totalorder %s17, 0
      %p37 = por %p35, %p36
      %p38 = scmp.ne.s32.totalorder %s27, %s30
      %p39 = scmp.eq.s32.totalorder %s22, 1
      %p40 = por %p38, %p39
      %p41 = scmp.ne.s32.totalorder %s30, %s31
      %p42 = scmp.eq.s32.totalorder %s22, 0
      %p43 = por %p41, %p42
      %p44 = scmp.ne.s32.totalorder %s30, %s31
      %p45 = scmp.eq.s32.totalorder %s23, 1
      %p46 = por %p44, %p45
      %p48 = scmp.ne.s32.totalorder %s31, %s47
      %p49 = scmp.eq.s32.totalorder %s23, 0
      %p50 = por %p48, %p49
      %s51 = ssub.s32 %s17, %s24
      %p52 = scmp.eq.s32.totalorder %s51, 0
      %s54 = sadd.s32 %s53, 1
      %s55 = scalar_select %p52, %s53, %s54
      %p58 = pneg %p52
      %p59 = scmp.eq.s32.totalorder %s17, 1
      %p60 = por %p58, %p59
      %p61 = scmp.ne.s32.totalorder %s53, %s56
      %p62 = scmp.eq.s32.totalorder %s17, 0
      %p63 = por %p61, %p62
      %p64 = scmp.ne.s32.totalorder %s53, %s56
      %p65 = scmp.eq.s32.totalorder %s22, 1
      %p66 = por %p64, %p65
      %p67 = scmp.ne.s32.totalorder %s56, %s57
      %p68 = scmp.eq.s32.totalorder %s22, 0
      %p69 = por %p67, %p68
      %p70 = scmp.ne.s32.totalorder %s56, %s57
      %p71 = scmp.eq.s32.totalorder %s23, 1
      %p72 = por %p70, %p71
      %p74 = scmp.ne.s32.totalorder %s57, %s73
      %p75 = scmp.eq.s32.totalorder %s23, 0
      %p76 = por %p74, %p75
      %s78 = sadd.s32 %s77, 1
      %p81 = scmp.eq.s32.totalorder %s17, 1
      %p82 = scmp.ne.s32.totalorder %s77, %s79
      %p83 = scmp.eq.s32.totalorder %s17, 0
      %p84 = por %p82, %p83
      %p85 = scmp.ne.s32.totalorder %s77, %s79
      %p86 = scmp.eq.s32.totalorder %s22, 1
      %p87 = por %p85, %p86
      %p88 = scmp.ne.s32.totalorder %s79, %s80
      %p89 = scmp.eq.s32.totalorder %s22, 0
      %p90 = por %p88, %p89
      %p91 = scmp.ne.s32.totalorder %s79, %s80
      %p92 = scmp.eq.s32.totalorder %s23, 1
      %p93 = por %p91, %p92
      %p95 = scmp.ne.s32.totalorder %s80, %s94
      %p96 = scmp.eq.s32.totalorder %s23, 0
      %p97 = por %p95, %p96
      %s99 = sadd.s32 %s98, 1
      %p102 = scmp.eq.s32.totalorder %s17, 1
      %p103 = scmp.ne.s32.totalorder %s98, %s100
      %p104 = scmp.eq.s32.totalorder %s17, 0
      %p105 = por %p103, %p104
      %p106 = scmp.ne.s32.totalorder %s98, %s100
      %p107 = scmp.eq.s32.totalorder %s22, 1
      %p108 = por %p106, %p107
      %p109 = scmp.ne.s32.totalorder %s100, %s101
      %p110 = scmp.eq.s32.totalorder %s22, 0
      %p111 = por %p109, %p110
      %p112 = scmp.ne.s32.totalorder %s100, %s101
      %p113 = scmp.eq.s32.totalorder %s23, 1
      %p114 = por %p112, %p113
      %p116 = scmp.ne.s32.totalorder %s101, %s115
      %p117 = scmp.eq.s32.totalorder %s23, 0
      %p118 = por %p116, %p117
      %s120 = sadd.s32 %s119, 1
      %p123 = scmp.eq.s32.totalorder %s17, 1
      %p124 = scmp.ne.s32.totalorder %s119, %s121
      %p125 = scmp.eq.s32.totalorder %s17, 0
      %p126 = por %p124, %p125
      %p127 = scmp.ne.s32.totalorder %s119, %s121
      %p128 = scmp.eq.s32.totalorder %s22, 1
      %p129 = por %p127, %p128
      %p130 = scmp.ne.s32.totalorder %s121, %s122
      %p131 = scmp.eq.s32.totalorder %s22, 0
      %p132 = por %p130, %p131
      %p133 = scmp.ne.s32.totalorder %s121, %s122
      %p134 = scmp.eq.s32.totalorder %s23, 1
      %p135 = por %p133, %p134
      %p137 = scmp.ne.s32.totalorder %s122, %s136
      %p138 = scmp.eq.s32.totalorder %s23, 0
      %p139 = por %p137, %p138
      %s141 = sadd.s32 %s140, 1
      %p144 = scmp.eq.s32.totalorder %s17, 1
      %p145 = scmp.ne.s32.totalorder %s140, %s142
      %p146 = scmp.eq.s32.totalorder %s17, 0
      %p147 = por %p145, %p146
      %p148 = scmp.ne.s32.totalorder %s140, %s142
      %p149 = scmp.eq.s32.totalorder %s22, 1
      %p150 = por %p148, %p149
      %p151 = scmp.ne.s32.totalorder %s142, %s143
      %p152 = scmp.eq.s32.totalorder %s22, 0
      %p153 = por %p151, %p152
      %p154 = scmp.ne.s32.totalorder %s142, %s143
      %p155 = scmp.eq.s32.totalorder %s23, 1
      %p156 = por %p154, %p155
      %p158 = scmp.ne.s32.totalorder %s143, %s157
      %p159 = scmp.eq.s32.totalorder %s23, 0
      %p160 = por %p158, %p159
      %s162 = sadd.s32 %s161, 1
      %p165 = scmp.eq.s32.totalorder %s17, 1
      %p166 = scmp.ne.s32.totalorder %s161, %s163
      %p167 = scmp.eq.s32.totalorder %s17, 0
      %p168 = por %p166, %p167
      %p169 = scmp.ne.s32.totalorder %s161, %s163
      %p170 = scmp.eq.s32.totalorder %s22, 1
      %p171 = por %p169, %p170
      %p172 = scmp.ne.s32.totalorder %s163, %s164
      %p173 = scmp.eq.s32.totalorder %s22, 0
      %p174 = por %p172, %p173
      %p175 = scmp.ne.s32.totalorder %s163, %s164
      %p176 = scmp.eq.s32.totalorder %s23, 1
      %p177 = por %p175, %p176
      %p179 = scmp.ne.s32.totalorder %s164, %s178
      %p180 = scmp.eq.s32.totalorder %s23, 0
      %p181 = por %p179, %p180
      %s183 = sadd.s32 %s182, 1
      %p186 = scmp.eq.s32.totalorder %s17, 1
      %p187 = scmp.ne.s32.totalorder %s182, %s184
      %p188 = scmp.eq.s32.totalorder %s17, 0
      %p189 = por %p187, %p188
      %p190 = scmp.ne.s32.totalorder %s182, %s184
      %p191 = scmp.eq.s32.totalorder %s22, 1
      %p192 = por %p190, %p191
      %p193 = scmp.ne.s32.totalorder %s184, %s185
      %p194 = scmp.eq.s32.totalorder %s22, 0
      %p195 = por %p193, %p194
      %p196 = scmp.ne.s32.totalorder %s184, %s185
      %p197 = scmp.eq.s32.totalorder %s23, 1
      %p198 = por %p196, %p197
      %p200 = scmp.ne.s32.totalorder %s185, %s199
      %p201 = scmp.eq.s32.totalorder %s23, 0
      %p202 = por %p200, %p201
      %s203 = ssub.s32 %s17, %s24
      %p204 = scmp.eq.s32.totalorder %s203, 0
      %s206 = sadd.s32 %s205, 1
      %s207 = scalar_select %p204, %s205, %s206
      %p210 = pneg %p204
      %p211 = scmp.eq.s32.totalorder %s17, 1
      %p212 = por %p210, %p211
      %p213 = scmp.ne.s32.totalorder %s205, %s208
      %p214 = scmp.eq.s32.totalorder %s17, 0
      %p215 = por %p213, %p214
      %p216 = scmp.ne.s32.totalorder %s205, %s208
      %p217 = scmp.eq.s32.totalorder %s22, 1
      %p218 = por %p216, %p217
      %p219 = scmp.ne.s32.totalorder %s208, %s209
      %p220 = scmp.eq.s32.totalorder %s22, 0
      %p221 = por %p219, %p220
      %p222 = scmp.ne.s32.totalorder %s208, %s209
      %p223 = scmp.eq.s32.totalorder %s23, 1
      %p224 = por %p222, %p223
      %p226 = scmp.ne.s32.totalorder %s209, %s225
      %p227 = scmp.eq.s32.totalorder %s23, 0
      %p228 = por %p226, %p227
      %p229 = scmp.le.s32.totalorder 1, %s17
      %p230 = scmp.lt.s32.totalorder %s17, 3
      %p231 = pnand %p229, %p230
      %p232 = pneg %p231
      // Predicated region
      $region9: #{tpu_custom_call.1} parent=5 // pred_check
        _
      $region10: #{tpu_custom_call.1} parent=5 // pred_check_branch
        %234 = sbr.rel (%p231) target = $region12
      $region11: #{tpu_custom_call.1} parent=5 // pred_region
        %s235 = ssub.s32 %s17, 1
        // Predicated region
        $region13: #{tpu_custom_call.1} parent=11 // pred_check
          %p236 = pneg %p90
        $region14: #{tpu_custom_call.1} parent=11 // pred_check_branch
          %238 = sbr.rel (%p236) target = $region16
        $region15: #{tpu_custom_call.1} parent=11 // pred_region
          _
        $region16: #{tpu_custom_call.1} parent=11 // pred_fallthru
          _
        // Predicated region
        $region17: #{tpu_custom_call.1} parent=11 // pred_check
          %p239 = pneg %p111
        $region18: #{tpu_custom_call.1} parent=11 // pred_check_branch
          %241 = sbr.rel (%p239) target = $region20
        $region19: #{tpu_custom_call.1} parent=11 // pred_region
          _
        $region20: #{tpu_custom_call.1} parent=11 // pred_fallthru
          _
        // Predicated region
        $region21: #{tpu_custom_call.1} parent=11 // pred_check
          %p242 = pneg %p132
        $region22: #{tpu_custom_call.1} parent=11 // pred_check_branch
          %244 = sbr.rel (%p242) target = $region24
        $region23: #{tpu_custom_call.1} parent=11 // pred_region
          _
        $region24: #{tpu_custom_call.1} parent=11 // pred_fallthru
          _
        // Predicated region
        $region25: #{tpu_custom_call.1} parent=11 // pred_check
          %p245 = pneg %p153
        $region26: #{tpu_custom_call.1} parent=11 // pred_check_branch
          %247 = sbr.rel (%p245) target = $region28
        $region27: #{tpu_custom_call.1} parent=11 // pred_region
          _
        $region28: #{tpu_custom_call.1} parent=11 // pred_fallthru
          _
        // Predicated region
        $region29: #{tpu_custom_call.1} parent=11 // pred_check
          %p248 = pneg %p174
        $region30: #{tpu_custom_call.1} parent=11 // pred_check_branch
          %250 = sbr.rel (%p248) target = $region32
        $region31: #{tpu_custom_call.1} parent=11 // pred_region
          _
        $region32: #{tpu_custom_call.1} parent=11 // pred_fallthru
          _
        // Predicated region
        $region33: #{tpu_custom_call.1} parent=11 // pred_check
          %p251 = pneg %p195
        $region34: #{tpu_custom_call.1} parent=11 // pred_check_branch
          %253 = sbr.rel (%p251) target = $region36
        $region35: #{tpu_custom_call.1} parent=11 // pred_region
          _
        $region36: #{tpu_custom_call.1} parent=11 // pred_fallthru
          _
      $region12: #{tpu_custom_call.1} parent=5 // pred_fallthru
        _
      %p254 = scmp.lt.s32.totalorder %s17, 2
      // Predicated region
      $region37: #{tpu_custom_call.1} parent=5 // pred_check
        %p255 = pneg %p254
      $region38: #{tpu_custom_call.1} parent=5 // pred_check_branch
        %257 = sbr.rel (%p255) target = $region40
      $region39: #{tpu_custom_call.1} parent=5 // pred_region
        // Predicated region
        $region41: #{tpu_custom_call.1} parent=39 // pred_check
          %p258 = pneg %p37
        $region42: #{tpu_custom_call.1} parent=39 // pred_check_branch
          %260 = sbr.rel (%p258) target = $region44
        $region43: #{tpu_custom_call.1} parent=39 // pred_region
          %s261 = smul.u32 16, %s17
          %p262 = scmp.lt.s32.totalorder %s261, 31
          %s263 = scalar_select %p262, %s261, 31
          %s264 = smul.addr %s263, 4
          %s265 = scalar_lea.vmem %s0, %s264
          %s266 = smul.u32 16, %s17
        $region44: #{tpu_custom_call.1} parent=39 // pred_fallthru
          _
        // Predicated region
        $region45: #{tpu_custom_call.1} parent=39 // pred_check
          %p267 = pneg %p63
        $region46: #{tpu_custom_call.1} parent=39 // pred_check_branch
          %269 = sbr.rel (%p267) target = $region48
        $region47: #{tpu_custom_call.1} parent=39 // pred_region
          %s270 = smul.u32 16, %s17
          %p271 = scmp.lt.s32.totalorder %s270, 31
          %s272 = scalar_select %p271, %s270, 31
          %s273 = smul.addr %s272, 4
          %s274 = scalar_lea.vmem %s1, %s273
          %s275 = smul.u32 16, %s17
        $region48: #{tpu_custom_call.1} parent=39 // pred_fallthru
          _
      $region40: #{tpu_custom_call.1} parent=5 // pred_fallthru
        _
      %p276 = scmp.le.s32.totalorder 1, %s17
      %p277 = scmp.lt.s32.totalorder %s17, 3
      %p278 = pnand %p276, %p277
      %p279 = pneg %p278
      // Predicated region
      $region49: #{tpu_custom_call.1} parent=5 // pred_check
        _
      $region50: #{tpu_custom_call.1} parent=5 // pred_check_branch
        %281 = sbr.rel (%p278) target = $region52
      $region51: #{tpu_custom_call.1} parent=5 // pred_region
        %s282 = ssub.s32 %s17, 1
        %s283 = smul.u32 16, %s22
        %p284 = scmp.lt.s32.totalorder %s283, 31
        %s285 = scalar_select %p284, %s283, 31
        %s286 = smul.addr %s285, 4
        %s287 = scalar_lea.vmem %s0, %s286
        %p288 = pneg %p43
        %p289 = pneg %p40
        %s290 = smul.u32 16, %s22
        %p291 = scmp.lt.s32.totalorder %s290, 31
        %s292 = scalar_select %p291, %s290, 31
        %s293 = smul.addr %s292, 4
        %s294 = scalar_lea.vmem %s1, %s293
        %p295 = pneg %p69
        %p296 = pneg %p66
        %p297 = pneg %p90
        %p298 = pneg %p87
        %p299 = pneg %p111
        %p300 = pneg %p108
        %p301 = pneg %p132
        %p302 = pneg %p129
        %p303 = pneg %p153
        %p304 = pneg %p150
        %p305 = pneg %p174
        %p306 = pneg %p171
        %p307 = pneg %p195
        %p308 = pneg %p192
        %p309 = pneg %p221
        %p310 = pneg %p218
        %s311 = sand.u32 %s208, 1
        %s312 = scalar_lea.sflag [#allocation3], %s311
        %s313 = sand.u32 %s208, 1
        %s314 = smul.addr %s313, 16
        %s315 = scalar_lea.vmem [#allocation2], %s314
        %s316 = smul.u32 16, %s22
        %p317 = scmp.lt.s32.totalorder %s316, 31
        %s318 = scalar_select %p317, %s316, 31
        %s319 = smul.addr %s318, 4
        %s320 = scalar_lea.vmem %s0, %s319
        %s321 = smul.u32 16, %s22
        %s322 = smul.u32 16, %s22
        %p323 = scmp.lt.s32.totalorder %s322, 31
        %s324 = scalar_select %p323, %s322, 31
        %s325 = smul.addr %s324, 4
        %s326 = scalar_lea.vmem %s1, %s325
        %s327 = smul.u32 16, %s22
        %s328 = smul.u32 2, %s22
        %v330 = vld [vmem:[%s320] sm:$0xf]
        %v331 = vld [vmem:[%s320 + $0x4] sm:$0xf]
        %v332 = vld [vmem:[%s320 + $0x8] sm:$0xf]
        %v333 = vld [vmem:[%s320 + $0xc] sm:$0xf]
        %v334 = vld [vmem:[%s320 + $0x10] sm:$0xf]
        %v335 = vld [vmem:[%s320 + $0x14] sm:$0xf]
        %v336 = vld [vmem:[%s320 + $0x18] sm:$0xf]
        %v337 = vld [vmem:[%s320 + $0x1c] sm:$0xf]
        %v338 = vld [vmem:[%s320 + $0x20] sm:$0xf]
        %v339 = vld [vmem:[%s320 + $0x24] sm:$0xf]
        %v340 = vld [vmem:[%s320 + $0x28] sm:$0xf]
        %v341 = vld [vmem:[%s320 + $0x2c] sm:$0xf]
        %v342 = vld [vmem:[%s320 + $0x30] sm:$0xf]
        %v343 = vld [vmem:[%s320 + $0x34] sm:$0xf]
        %v344 = vld [vmem:[%s320 + $0x38] sm:$0xf]
        %v345 = vld [vmem:[%s320 + $0x3c] sm:$0xf]
        %v346 = vld [vmem:[%s2] sm:$0xf]
        %v347 = vld [vmem:[%s2 + $0x4] sm:$0xf]
        %v348 = vld [vmem:[%s2 + $0x8] sm:$0xf]
        %v349 = vld [vmem:[%s2 + $0xc] sm:$0xf]
        %v350 = vld [vmem:[%s3] sm:$0x1]
        %v352 = vlaneseq
        %v353 = vshrl.u32 %v352, 7
        %v354 = vsub.s32 0, %v353
        %v355 = vrot.slane %v350, %v354
        %v373 = vunpack.c.l.b16 %v330
        %v374 = vunpack.c.l.b16 %v331
        %v375 = vunpack.c.l.b16 %v332
        %v376 = vunpack.c.l.b16 %v333
        %v377 = vunpack.c.l.b16 %v334
        %v378 = vunpack.c.l.b16 %v335
        %v379 = vunpack.c.l.b16 %v336
        %v380 = vunpack.c.l.b16 %v337
        %v381 = vunpack.c.l.b16 %v338
        %v382 = vunpack.c.l.b16 %v339
        %v383 = vunpack.c.l.b16 %v340
        %v384 = vunpack.c.l.b16 %v341
        %v385 = vunpack.c.l.b16 %v342
        %v386 = vunpack.c.l.b16 %v343
        %v387 = vunpack.c.l.b16 %v344
        %v388 = vunpack.c.l.b16 %v345
        %v389 = vpack.c.b16 %v374, %v373
        %v390 = vpack.c.b16 %v376, %v375
        %v391 = vpack.c.b16 %v378, %v377
        %v392 = vpack.c.b16 %v380, %v379
        %v393 = vpack.c.b16 %v382, %v381
        %v394 = vpack.c.b16 %v384, %v383
        %v395 = vpack.c.b16 %v386, %v385
        %v396 = vpack.c.b16 %v388, %v387
        %v401 = vunpack.c.l.b16 %v346
        %v402 = vunpack.c.l.b16 %v347
        %v403 = vunpack.c.l.b16 %v348
        %v404 = vunpack.c.l.b16 %v349
        %v405 = vpack.c.b16 %v402, %v401
        %v406 = vpack.c.b16 %v404, %v403
        %vm409 = vcmask 261120
        %v411 = vsel %vm409, %v389, 0
        %v414 = vsel %vm409, %v390, 0
        %v417 = vsel %vm409, %v391, 0
        %v420 = vsel %vm409, %v392, 0
        %v423 = vsel %vm409, %v393, 0
        %v426 = vsel %vm409, %v394, 0
        %v429 = vsel %vm409, %v395, 0
        %v432 = vsel %vm409, %v396, 0
        %434 = vmatprep.subr.bf16.mxu0 0
        %435 = vmatpush1.bf16.msra.mxu0 %v405
        %436 = vmatprep.subr.bf16.mxu0 0
        %437 = vmatpush1.bf16.msra.mxu0 %v406
        %438 = vmatprep.subr.bf16.mxu0 0
        %439 = vmatpush1.bf16.msra.mxu0 0
        %440 = vmatprep.subr.bf16.mxu0 0
        %441 = vmatpush1.bf16.msra.mxu0 0
        %442 = vmatprep.subr.bf16.mxu0 0
        %443 = vmatpush1.bf16.msra.mxu0 0
        %444 = vmatprep.subr.bf16.mxu0 0
        %445 = vmatpush1.bf16.msra.mxu0 0
        %446 = vmatprep.subr.bf16.mxu0 0
        %447 = vmatpush1.bf16.msra.mxu0 0
        %448 = vmatprep.subr.bf16.mxu0 0
        %449 = vmatpush1.bf16.msra.mxu0 0
        %450 = vmatprep.subr.bf16.mxu0 0
        %451 = vmatpush1.bf16.msra.mxu0 0
        %452 = vmatprep.subr.bf16.mxu0 0
        %453 = vmatpush1.bf16.msra.mxu0 0
        %454 = vmatprep.subr.bf16.mxu0 0
        %455 = vmatpush1.bf16.msra.mxu0 0
        %456 = vmatprep.subr.bf16.mxu0 0
        %457 = vmatpush1.bf16.msra.mxu0 0
        %458 = vmatprep.subr.bf16.mxu0 0
        %459 = vmatpush1.bf16.msra.mxu0 0
        %460 = vmatprep.subr.bf16.mxu0 0
        %461 = vmatpush1.bf16.msra.mxu0 0
        %462 = vmatprep.subr.bf16.mxu0 0
        %463 = vmatpush1.bf16.msra.mxu0 0
        %464 = vmatprep.subr.bf16.mxu0 0
        %465 = vmatpush1.bf16.msra.mxu0 0
        %466 = vmatprep.mubr.bf16.mxu0 0
        %467 = vmatmul.mubr.bf16.gmra.mrb[0].mxu0 %v411
        %v468 = vpop.f32.mrb[0].mxu0
        %v469 = vadd.f32 %v355, %v468
        %v470 = vpop.f32.mrb[0].mxu0
        %v471 = vpop.f32.mrb[0].mxu0
        %v472 = vadd.f32 %v355, %v471
        %v473 = vpop.f32.mrb[0].mxu0
        %474 = vmatprep.mubr.bf16.mxu0 0
        %475 = vmatmul.mubr.bf16.gmra.mrb[0].mxu0 %v414
        %v476 = vpop.f32.mrb[0].mxu0
        %v477 = vadd.f32 %v355, %v476
        %v478 = vpop.f32.mrb[0].mxu0
        %v479 = vpop.f32.mrb[0].mxu0
        %v480 = vadd.f32 %v355, %v479
        %v481 = vpop.f32.mrb[0].mxu0
        %482 = vmatprep.mubr.bf16.mxu0 0
        %483 = vmatmul.mubr.bf16.gmra.mrb[0].mxu0 %v417
        %v484 = vpop.f32.mrb[0].mxu0
        %v485 = vadd.f32 %v355, %v484
        %v486 = vpop.f32.mrb[0].mxu0
        %v487 = vpop.f32.mrb[0].mxu0
        %v488 = vadd.f32 %v355, %v487
        %v489 = vpop.f32.mrb[0].mxu0
        %490 = vmatprep.mubr.bf16.mxu0 0
        %491 = vmatmul.mubr.bf16.gmra.mrb[0].mxu0 %v420
        %v492 = vpop.f32.mrb[0].mxu0
        %v493 = vadd.f32 %v355, %v492
        %v494 = vpop.f32.mrb[0].mxu0
        %v495 = vpop.f32.mrb[0].mxu0
        %v496 = vadd.f32 %v355, %v495
        %v497 = vpop.f32.mrb[0].mxu0
        %498 = vmatprep.mubr.bf16.mxu0 0
        %499 = vmatmul.mubr.bf16.gmra.mrb[0].mxu0 %v423
        %v500 = vpop.f32.mrb[0].mxu0
        %v501 = vadd.f32 %v355, %v500
        %v502 = vpop.f32.mrb[0].mxu0
        %v503 = vpop.f32.mrb[0].mxu0
        %v504 = vadd.f32 %v355, %v503
        %v505 = vpop.f32.mrb[0].mxu0
        %506 = vmatprep.mubr.bf16.mxu0 0
        %507 = vmatmul.mubr.bf16.gmra.mrb[0].mxu0 %v426
        %v508 = vpop.f32.mrb[0].mxu0
        %v509 = vadd.f32 %v355, %v508
        %v510 = vpop.f32.mrb[0].mxu0
        %v511 = vpop.f32.mrb[0].mxu0
        %v512 = vadd.f32 %v355, %v511
        %v513 = vpop.f32.mrb[0].mxu0
        %514 = vmatprep.mubr.bf16.mxu0 0
        %515 = vmatmul.mubr.bf16.gmra.mrb[0].mxu0 %v429
        %v516 = vpop.f32.mrb[0].mxu0
        %v517 = vadd.f32 %v355, %v516
        %v518 = vpop.f32.mrb[0].mxu0
        %v519 = vpop.f32.mrb[0].mxu0
        %v520 = vadd.f32 %v355, %v519
        %v521 = vpop.f32.mrb[0].mxu0
        %522 = vmatprep.mubr.bf16.mxu0 0
        %523 = vmatmul.mubr.bf16.gmra.mrb[0].mxu0 %v432
        %v524 = vpop.f32.mrb[0].mxu0
        %v525 = vadd.f32 %v355, %v524
        %v526 = vpop.f32.mrb[0].mxu0
        %v527 = vpop.f32.mrb[0].mxu0
        %v528 = vadd.f32 %v355, %v527
        %v529 = vpop.f32.mrb[0].mxu0
        %530 = vdwg.mxu0
        %v531 = vmax.f32 %v469, 0.0
        %v532 = vmax.f32 %v472, 0.0
        %v533 = vmax.f32 %v477, 0.0
        %v534 = vmax.f32 %v480, 0.0
        %v535 = vmax.f32 %v485, 0.0
        %v536 = vmax.f32 %v488, 0.0
        %v537 = vmax.f32 %v493, 0.0
        %v538 = vmax.f32 %v496, 0.0
        %v539 = vmax.f32 %v501, 0.0
        %v540 = vmax.f32 %v504, 0.0
        %v541 = vmax.f32 %v509, 0.0
        %v542 = vmax.f32 %v512, 0.0
        %v543 = vmax.f32 %v517, 0.0
        %v544 = vmax.f32 %v520, 0.0
        %v545 = vmax.f32 %v525, 0.0
        %v546 = vmax.f32 %v528, 0.0
        %v547 = vld [vmem:[%s326] sm:$0xf]
        %v548 = vld [vmem:[%s326 + $0x4] sm:$0xf]
        %v549 = vld [vmem:[%s326 + $0x8] sm:$0xf]
        %v550 = vld [vmem:[%s326 + $0xc] sm:$0xf]
        %v551 = vld [vmem:[%s326 + $0x10] sm:$0xf]
        %v552 = vld [vmem:[%s326 + $0x14] sm:$0xf]
        %v553 = vld [vmem:[%s326 + $0x18] sm:$0xf]
        %v554 = vld [vmem:[%s326 + $0x1c] sm:$0xf]
        %v555 = vld [vmem:[%s326 + $0x20] sm:$0xf]
        %v556 = vld [vmem:[%s326 + $0x24] sm:$0xf]
        %v557 = vld [vmem:[%s326 + $0x28] sm:$0xf]
        %v558 = vld [vmem:[%s326 + $0x2c] sm:$0xf]
        %v559 = vld [vmem:[%s326 + $0x30] sm:$0xf]
        %v560 = vld [vmem:[%s326 + $0x34] sm:$0xf]
        %v561 = vld [vmem:[%s326 + $0x38] sm:$0xf]
        %v562 = vld [vmem:[%s326 + $0x3c] sm:$0xf]
        %v563 = vld [vmem:[%s4] sm:$0xf]
        %v564 = vld [vmem:[%s4 + $0x4] sm:$0xf]
        %v565 = vld [vmem:[%s4 + $0x8] sm:$0xf]
        %v566 = vld [vmem:[%s4 + $0xc] sm:$0xf]
        %v567 = vld [vmem:[%s5] sm:$0x1]
        %v569 = vlaneseq
        %v570 = vshrl.u32 %v569, 7
        %v571 = vsub.s32 0, %v570
        %v572 = vrot.slane %v567, %v571
        %v590 = vunpack.c.l.b16 %v547
        %v591 = vunpack.c.l.b16 %v548
        %v592 = vunpack.c.l.b16 %v549
        %v593 = vunpack.c.l.b16 %v550
        %v594 = vunpack.c.l.b16 %v551
        %v595 = vunpack.c.l.b16 %v552
        %v596 = vunpack.c.l.b16 %v553
        %v597 = vunpack.c.l.b16 %v554
        %v598 = vunpack.c.l.b16 %v555
        %v599 = vunpack.c.l.b16 %v556
        %v600 = vunpack.c.l.b16 %v557
        %v601 = vunpack.c.l.b16 %v558
        %v602 = vunpack.c.l.b16 %v559
        %v603 = vunpack.c.l.b16 %v560
        %v604 = vunpack.c.l.b16 %v561
        %v605 = vunpack.c.l.b16 %v562
        %v606 = vpack.c.b16 %v591, %v590
        %v607 = vpack.c.b16 %v593, %v592
        %v608 = vpack.c.b16 %v595, %v594
        %v609 = vpack.c.b16 %v597, %v596
        %v610 = vpack.c.b16 %v599, %v598
        %v611 = vpack.c.b16 %v601, %v600
        %v612 = vpack.c.b16 %v603, %v602
        %v613 = vpack.c.b16 %v605, %v604
        %v618 = vunpack.c.l.b16 %v563
        %v619 = vunpack.c.l.b16 %v564
        %v620 = vunpack.c.l.b16 %v565
        %v621 = vunpack.c.l.b16 %v566
        %v622 = vpack.c.b16 %v619, %v618
        %v623 = vpack.c.b16 %v621, %v620
        %v627 = vsel %vm409, %v606, 0
        %v630 = vsel %vm409, %v607, 0
        %v633 = vsel %vm409, %v608, 0
        %v636 = vsel %vm409, %v609, 0
        %v639 = vsel %vm409, %v610, 0
        %v642 = vsel %vm409, %v611, 0
        %v645 = vsel %vm409, %v612, 0
        %v648 = vsel %vm409, %v613, 0
        %650 = vmatprep.subr.bf16.mxu0 0
        %651 = vmatpush1.bf16.msra.mxu0 %v622
        %652 = vmatprep.subr.bf16.mxu0 0
        %653 = vmatpush1.bf16.msra.mxu0 %v623
        %654 = vmatprep.subr.bf16.mxu0 0
        %655 = vmatpush1.bf16.msra.mxu0 0
        %656 = vmatprep.subr.bf16.mxu0 0
        %657 = vmatpush1.bf16.msra.mxu0 0
        %658 = vmatprep.subr.bf16.mxu0 0
        %659 = vmatpush1.bf16.msra.mxu0 0
        %660 = vmatprep.subr.bf16.mxu0 0
        %661 = vmatpush1.bf16.msra.mxu0 0
        %662 = vmatprep.subr.bf16.mxu0 0
        %663 = vmatpush1.bf16.msra.mxu0 0
        %664 = vmatprep.subr.bf16.mxu0 0
        %665 = vmatpush1.bf16.msra.mxu0 0
        %666 = vmatprep.subr.bf16.mxu0 0
        %667 = vmatpush1.bf16.msra.mxu0 0
        %668 = vmatprep.subr.bf16.mxu0 0
        %669 = vmatpush1.bf16.msra.mxu0 0
        %670 = vmatprep.subr.bf16.mxu0 0
        %671 = vmatpush1.bf16.msra.mxu0 0
        %672 = vmatprep.subr.bf16.mxu0 0
        %673 = vmatpush1.bf16.msra.mxu0 0
        %674 = vmatprep.subr.bf16.mxu0 0
        %675 = vmatpush1.bf16.msra.mxu0 0
        %676 = vmatprep.subr.bf16.mxu0 0
        %677 = vmatpush1.bf16.msra.mxu0 0
        %678 = vmatprep.subr.bf16.mxu0 0
        %679 = vmatpush1.bf16.msra.mxu0 0
        %680 = vmatprep.subr.bf16.mxu0 0
        %681 = vmatpush1.bf16.msra.mxu0 0
        %682 = vmatprep.mubr.bf16.mxu0 0
        %683 = vmatmul.mubr.bf16.gmra.mrb[0].mxu0 %v627
        %v684 = vpop.f32.mrb[0].mxu0
        %v685 = vadd.f32 %v572, %v684
        %v686 = vpop.f32.mrb[0].mxu0
        %v687 = vpop.f32.mrb[0].mxu0
        %v688 = vadd.f32 %v572, %v687
        %v689 = vpop.f32.mrb[0].mxu0
        %690 = vmatprep.mubr.bf16.mxu0 0
        %691 = vmatmul.mubr.bf16.gmra.mrb[0].mxu0 %v630
        %v692 = vpop.f32.mrb[0].mxu0
        %v693 = vadd.f32 %v572, %v692
        %v694 = vpop.f32.mrb[0].mxu0
        %v695 = vpop.f32.mrb[0].mxu0
        %v696 = vadd.f32 %v572, %v695
        %v697 = vpop.f32.mrb[0].mxu0
        %698 = vmatprep.mubr.bf16.mxu0 0
        %699 = vmatmul.mubr.bf16.gmra.mrb[0].mxu0 %v633
        %v700 = vpop.f32.mrb[0].mxu0
        %v701 = vadd.f32 %v572, %v700
        %v702 = vpop.f32.mrb[0].mxu0
        %v703 = vpop.f32.mrb[0].mxu0
        %v704 = vadd.f32 %v572, %v703
        %v705 = vpop.f32.mrb[0].mxu0
        %706 = vmatprep.mubr.bf16.mxu0 0
        %707 = vmatmul.mubr.bf16.gmra.mrb[0].mxu0 %v636
        %v708 = vpop.f32.mrb[0].mxu0
        %v709 = vadd.f32 %v572, %v708
        %v710 = vpop.f32.mrb[0].mxu0
        %v711 = vpop.f32.mrb[0].mxu0
        %v712 = vadd.f32 %v572, %v711
        %v713 = vpop.f32.mrb[0].mxu0
        %714 = vmatprep.mubr.bf16.mxu0 0
        %715 = vmatmul.mubr.bf16.gmra.mrb[0].mxu0 %v639
        %v716 = vpop.f32.mrb[0].mxu0
        %v717 = vadd.f32 %v572, %v716
        %v718 = vpop.f32.mrb[0].mxu0
        %v719 = vpop.f32.mrb[0].mxu0
        %v720 = vadd.f32 %v572, %v719
        %v721 = vpop.f32.mrb[0].mxu0
        %722 = vmatprep.mubr.bf16.mxu0 0
        %723 = vmatmul.mubr.bf16.gmra.mrb[0].mxu0 %v642
        %v724 = vpop.f32.mrb[0].mxu0
        %v725 = vadd.f32 %v572, %v724
        %v726 = vpop.f32.mrb[0].mxu0
        %v727 = vpop.f32.mrb[0].mxu0
        %v728 = vadd.f32 %v572, %v727
        %v729 = vpop.f32.mrb[0].mxu0
        %730 = vmatprep.mubr.bf16.mxu0 0
        %731 = vmatmul.mubr.bf16.gmra.mrb[0].mxu0 %v645
        %v732 = vpop.f32.mrb[0].mxu0
        %v733 = vadd.f32 %v572, %v732
        %v734 = vpop.f32.mrb[0].mxu0
        %v735 = vpop.f32.mrb[0].mxu0
        %v736 = vadd.f32 %v572, %v735
        %v737 = vpop.f32.mrb[0].mxu0
        %738 = vmatprep.mubr.bf16.mxu0 0
        %739 = vmatmul.mubr.bf16.gmra.mrb[0].mxu0 %v648
        %v740 = vpop.f32.mrb[0].mxu0
        %v741 = vadd.f32 %v572, %v740
        %v742 = vpop.f32.mrb[0].mxu0
        %v743 = vpop.f32.mrb[0].mxu0
        %v744 = vadd.f32 %v572, %v743
        %v745 = vpop.f32.mrb[0].mxu0
        %746 = vdwg.mxu0
        %v747 = vmax.f32 %v685, 0.0
        %v748 = vmax.f32 %v688, 0.0
        %v749 = vmax.f32 %v693, 0.0
        %v750 = vmax.f32 %v696, 0.0
        %v751 = vmax.f32 %v701, 0.0
        %v752 = vmax.f32 %v704, 0.0
        %v753 = vmax.f32 %v709, 0.0
        %v754 = vmax.f32 %v712, 0.0
        %v755 = vmax.f32 %v717, 0.0
        %v756 = vmax.f32 %v720, 0.0
        %v757 = vmax.f32 %v725, 0.0
        %v758 = vmax.f32 %v728, 0.0
        %v759 = vmax.f32 %v733, 0.0
        %v760 = vmax.f32 %v736, 0.0
        %v761 = vmax.f32 %v741, 0.0
        %v762 = vmax.f32 %v744, 0.0
        %v763 = vpack.c.bf16 %v532, %v531
        %v764 = vpack.c.bf16 %v534, %v533
        %v765 = vpack.c.bf16 %v536, %v535
        %v766 = vpack.c.bf16 %v538, %v537
        %v767 = vpack.c.bf16 %v540, %v539
        %v768 = vpack.c.bf16 %v542, %v541
        %v769 = vpack.c.bf16 %v544, %v543
        %v770 = vpack.c.bf16 %v546, %v545
        %v771 = vld [vmem:[%s6] sm:$0xf]
        %v772 = vld [vmem:[%s6 + $0x4] sm:$0xf]
        %v773 = vld [vmem:[%s6 + $0x8] sm:$0xf]
        %v774 = vld [vmem:[%s6 + $0xc] sm:$0xf]
        %v775 = vld [vmem:[%s7] sm:$0x1]
        %v777 = vlaneseq
        %v778 = vshrl.u32 %v777, 7
        %v779 = vsub.s32 0, %v778
        %v780 = vrot.slane %v775, %v779
        %v786 = vunpack.c.l.b16 %v771
        %v787 = vunpack.c.l.b16 %v772
        %v788 = vunpack.c.l.b16 %v773
        %v789 = vunpack.c.l.b16 %v774
        %v790 = vpack.c.b16 %v787, %v786
        %v791 = vpack.c.b16 %v789, %v788
        %v795 = vsel %vm409, %v763, 0
        %v798 = vsel %vm409, %v764, 0
        %v801 = vsel %vm409, %v765, 0
        %v804 = vsel %vm409, %v766, 0
        %v807 = vsel %vm409, %v767, 0
        %v810 = vsel %vm409, %v768, 0
        %v813 = vsel %vm409, %v769, 0
        %v816 = vsel %vm409, %v770, 0
        %818 = vmatprep.subr.bf16.mxu0 0
        %819 = vmatpush1.bf16.msra.mxu0 %v790
        %820 = vmatprep.subr.bf16.mxu0 0
        %821 = vmatpush1.bf16.msra.mxu0 %v791
        %822 = vmatprep.subr.bf16.mxu0 0
        %823 = vmatpush1.bf16.msra.mxu0 0
        %824 = vmatprep.subr.bf16.mxu0 0
        %825 = vmatpush1.bf16.msra.mxu0 0
        %826 = vmatprep.subr.bf16.mxu0 0
        %827 = vmatpush1.bf16.msra.mxu0 0
        %828 = vmatprep.subr.bf16.mxu0 0
        %829 = vmatpush1.bf16.msra.mxu0 0
        %830 = vmatprep.subr.bf16.mxu0 0
        %831 = vmatpush1.bf16.msra.mxu0 0
        %832 = vmatprep.subr.bf16.mxu0 0
        %833 = vmatpush1.bf16.msra.mxu0 0
        %834 = vmatprep.subr.bf16.mxu0 0
        %835 = vmatpush1.bf16.msra.mxu0 0
        %836 = vmatprep.subr.bf16.mxu0 0
        %837 = vmatpush1.bf16.msra.mxu0 0
        %838 = vmatprep.subr.bf16.mxu0 0
        %839 = vmatpush1.bf16.msra.mxu0 0
        %840 = vmatprep.subr.bf16.mxu0 0
        %841 = vmatpush1.bf16.msra.mxu0 0
        %842 = vmatprep.subr.bf16.mxu0 0
        %843 = vmatpush1.bf16.msra.mxu0 0
        %844 = vmatprep.subr.bf16.mxu0 0
        %845 = vmatpush1.bf16.msra.mxu0 0
        %846 = vmatprep.subr.bf16.mxu0 0
        %847 = vmatpush1.bf16.msra.mxu0 0
        %848 = vmatprep.subr.bf16.mxu0 0
        %849 = vmatpush1.bf16.msra.mxu0 0
        %850 = vmatprep.mubr.bf16.mxu0 0
        %851 = vmatmul.mubr.bf16.gmra.mrb[0].mxu0 %v795
        %v852 = vpop.f32.mrb[0].mxu0
        %v853 = vadd.f32 %v780, %v852
        %v854 = vpop.f32.mrb[0].mxu0
        %v855 = vpop.f32.mrb[0].mxu0
        %v856 = vadd.f32 %v780, %v855
        %v857 = vpop.f32.mrb[0].mxu0
        %858 = vmatprep.mubr.bf16.mxu0 0
        %859 = vmatmul.mubr.bf16.gmra.mrb[0].mxu0 %v798
        %v860 = vpop.f32.mrb[0].mxu0
        %v861 = vadd.f32 %v780, %v860
        %v862 = vpop.f32.mrb[0].mxu0
        %v863 = vpop.f32.mrb[0].mxu0
        %v864 = vadd.f32 %v780, %v863
        %v865 = vpop.f32.mrb[0].mxu0
        %866 = vmatprep.mubr.bf16.mxu0 0
        %867 = vmatmul.mubr.bf16.gmra.mrb[0].mxu0 %v801
        %v868 = vpop.f32.mrb[0].mxu0
        %v869 = vadd.f32 %v780, %v868
        %v870 = vpop.f32.mrb[0].mxu0
        %v871 = vpop.f32.mrb[0].mxu0
        %v872 = vadd.f32 %v780, %v871
        %v873 = vpop.f32.mrb[0].mxu0
        %874 = vmatprep.mubr.bf16.mxu0 0
        %875 = vmatmul.mubr.bf16.gmra.mrb[0].mxu0 %v804
        %v876 = vpop.f32.mrb[0].mxu0
        %v877 = vadd.f32 %v780, %v876
        %v878 = vpop.f32.mrb[0].mxu0
        %v879 = vpop.f32.mrb[0].mxu0
        %v880 = vadd.f32 %v780, %v879
        %v881 = vpop.f32.mrb[0].mxu0
        %882 = vmatprep.mubr.bf16.mxu0 0
        %883 = vmatmul.mubr.bf16.gmra.mrb[0].mxu0 %v807
        %v884 = vpop.f32.mrb[0].mxu0
        %v885 = vadd.f32 %v780, %v884
        %v886 = vpop.f32.mrb[0].mxu0
        %v887 = vpop.f32.mrb[0].mxu0
        %v888 = vadd.f32 %v780, %v887
        %v889 = vpop.f32.mrb[0].mxu0
        %890 = vmatprep.mubr.bf16.mxu0 0
        %891 = vmatmul.mubr.bf16.gmra.mrb[0].mxu0 %v810
        %v892 = vpop.f32.mrb[0].mxu0
        %v893 = vadd.f32 %v780, %v892
        %v894 = vpop.f32.mrb[0].mxu0
        %v895 = vpop.f32.mrb[0].mxu0
        %v896 = vadd.f32 %v780, %v895
        %v897 = vpop.f32.mrb[0].mxu0
        %898 = vmatprep.mubr.bf16.mxu0 0
        %899 = vmatmul.mubr.bf16.gmra.mrb[0].mxu0 %v813
        %v900 = vpop.f32.mrb[0].mxu0
        %v901 = vadd.f32 %v780, %v900
        %v902 = vpop.f32.mrb[0].mxu0
        %v903 = vpop.f32.mrb[0].mxu0
        %v904 = vadd.f32 %v780, %v903
        %v905 = vpop.f32.mrb[0].mxu0
        %906 = vmatprep.mubr.bf16.mxu0 0
        %907 = vmatmul.mubr.bf16.gmra.mrb[0].mxu0 %v816
        %v908 = vpop.f32.mrb[0].mxu0
        %v909 = vadd.f32 %v780, %v908
        %v910 = vpop.f32.mrb[0].mxu0
        %v911 = vpop.f32.mrb[0].mxu0
        %v912 = vadd.f32 %v780, %v911
        %v913 = vpop.f32.mrb[0].mxu0
        %914 = vdwg.mxu0
        %v915 = vsel %vm409, %v853, 0.0
        %v916 = vrot.slane %v915, 4
        %v917 = vadd.f32 %v915, %v916
        %v918 = vrot.slane %v917, 2
        %v919 = vadd.f32 %v917, %v918
        %v920 = vrot.slane %v919, 1
        %v921 = vadd.f32 %v919, %v920
        %v922 = vsel %vm409, %v856, 0.0
        %v923 = vrot.slane %v922, 4
        %v924 = vadd.f32 %v922, %v923
        %v925 = vrot.slane %v924, 2
        %v926 = vadd.f32 %v924, %v925
        %v927 = vrot.slane %v926, 1
        %v928 = vadd.f32 %v926, %v927
        %v929 = vsel %vm409, %v861, 0.0
        %v930 = vrot.slane %v929, 4
        %v931 = vadd.f32 %v929, %v930
        %v932 = vrot.slane %v931, 2
        %v933 = vadd.f32 %v931, %v932
        %v934 = vrot.slane %v933, 1
        %v935 = vadd.f32 %v933, %v934
        %v936 = vsel %vm409, %v864, 0.0
        %v937 = vrot.slane %v936, 4
        %v938 = vadd.f32 %v936, %v937
        %v939 = vrot.slane %v938, 2
        %v940 = vadd.f32 %v938, %v939
        %v941 = vrot.slane %v940, 1
        %v942 = vadd.f32 %v940, %v941
        %v943 = vsel %vm409, %v869, 0.0
        %v944 = vrot.slane %v943, 4
        %v945 = vadd.f32 %v943, %v944
        %v946 = vrot.slane %v945, 2
        %v947 = vadd.f32 %v945, %v946
        %v948 = vrot.slane %v947, 1
        %v949 = vadd.f32 %v947, %v948
        %v950 = vsel %vm409, %v872, 0.0
        %v951 = vrot.slane %v950, 4
        %v952 = vadd.f32 %v950, %v951
        %v953 = vrot.slane %v952, 2
        %v954 = vadd.f32 %v952, %v953
        %v955 = vrot.slane %v954, 1
        %v956 = vadd.f32 %v954, %v955
        %v957 = vsel %vm409, %v877, 0.0
        %v958 = vrot.slane %v957, 4
        %v959 = vadd.f32 %v957, %v958
        %v960 = vrot.slane %v959, 2
        %v961 = vadd.f32 %v959, %v960
        %v962 = vrot.slane %v961, 1
        %v963 = vadd.f32 %v961, %v962
        %v964 = vsel %vm409, %v880, 0.0
        %v965 = vrot.slane %v964, 4
        %v966 = vadd.f32 %v964, %v965
        %v967 = vrot.slane %v966, 2
        %v968 = vadd.f32 %v966, %v967
        %v969 = vrot.slane %v968, 1
        %v970 = vadd.f32 %v968, %v969
        %v971 = vsel %vm409, %v885, 0.0
        %v972 = vrot.slane %v971, 4
        %v973 = vadd.f32 %v971, %v972
        %v974 = vrot.slane %v973, 2
        %v975 = vadd.f32 %v973, %v974
        %v976 = vrot.slane %v975, 1
        %v977 = vadd.f32 %v975, %v976
        %v978 = vsel %vm409, %v888, 0.0
        %v979 = vrot.slane %v978, 4
        %v980 = vadd.f32 %v978, %v979
        %v981 = vrot.slane %v980, 2
        %v982 = vadd.f32 %v980, %v981
        %v983 = vrot.slane %v982, 1
        %v984 = vadd.f32 %v982, %v983
        %v985 = vsel %vm409, %v893, 0.0
        %v986 = vrot.slane %v985, 4
        %v987 = vadd.f32 %v985, %v986
        %v988 = vrot.slane %v987, 2
        %v989 = vadd.f32 %v987, %v988
        %v990 = vrot.slane %v989, 1
        %v991 = vadd.f32 %v989, %v990
        %v992 = vsel %vm409, %v896, 0.0
        %v993 = vrot.slane %v992, 4
        %v994 = vadd.f32 %v992, %v993
        %v995 = vrot.slane %v994, 2
        %v996 = vadd.f32 %v994, %v995
        %v997 = vrot.slane %v996, 1
        %v998 = vadd.f32 %v996, %v997
        %v999 = vsel %vm409, %v901, 0.0
        %v1000 = vrot.slane %v999, 4
        %v1001 = vadd.f32 %v999, %v1000
        %v1002 = vrot.slane %v1001, 2
        %v1003 = vadd.f32 %v1001, %v1002
        %v1004 = vrot.slane %v1003, 1
        %v1005 = vadd.f32 %v1003, %v1004
        %v1006 = vsel %vm409, %v904, 0.0
        %v1007 = vrot.slane %v1006, 4
        %v1008 = vadd.f32 %v1006, %v1007
        %v1009 = vrot.slane %v1008, 2
        %v1010 = vadd.f32 %v1008, %v1009
        %v1011 = vrot.slane %v1010, 1
        %v1012 = vadd.f32 %v1010, %v1011
        %v1013 = vsel %vm409, %v909, 0.0
        %v1014 = vrot.slane %v1013, 4
        %v1015 = vadd.f32 %v1013, %v1014
        %v1016 = vrot.slane %v1015, 2
        %v1017 = vadd.f32 %v1015, %v1016
        %v1018 = vrot.slane %v1017, 1
        %v1019 = vadd.f32 %v1017, %v1018
        %v1020 = vsel %vm409, %v912, 0.0
        %v1021 = vrot.slane %v1020, 4
        %v1022 = vadd.f32 %v1020, %v1021
        %v1023 = vrot.slane %v1022, 2
        %v1024 = vadd.f32 %v1022, %v1023
        %v1025 = vrot.slane %v1024, 1
        %v1026 = vadd.f32 %v1024, %v1025
        %v1027 = vrcp.pop 8.0
        %v1028 = vmul.f32 %v921, %v1027
        %v1029 = vmul.f32 %v928, %v1027
        %v1030 = vmul.f32 %v935, %v1027
        %v1031 = vmul.f32 %v942, %v1027
        %v1032 = vmul.f32 %v949, %v1027
        %v1033 = vmul.f32 %v956, %v1027
        %v1034 = vmul.f32 %v963, %v1027
        %v1035 = vmul.f32 %v970, %v1027
        %v1036 = vmul.f32 %v977, %v1027
        %v1037 = vmul.f32 %v984, %v1027
        %v1038 = vmul.f32 %v991, %v1027
        %v1039 = vmul.f32 %v998, %v1027
        %v1040 = vmul.f32 %v1005, %v1027
        %v1041 = vmul.f32 %v1012, %v1027
        %v1042 = vmul.f32 %v1019, %v1027
        %v1043 = vmul.f32 %v1026, %v1027
        %v1044 = vsel %vm409, %v747, 0.0
        %v1045 = vrot.slane %v1044, 4
        %v1046 = vadd.f32 %v1044, %v1045
        %v1047 = vrot.slane %v1046, 2
        %v1048 = vadd.f32 %v1046, %v1047
        %v1049 = vrot.slane %v1048, 1
        %v1050 = vadd.f32 %v1048, %v1049
        %v1051 = vsel %vm409, %v748, 0.0
        %v1052 = vrot.slane %v1051, 4
        %v1053 = vadd.f32 %v1051, %v1052
        %v1054 = vrot.slane %v1053, 2
        %v1055 = vadd.f32 %v1053, %v1054
        %v1056 = vrot.slane %v1055, 1
        %v1057 = vadd.f32 %v1055, %v1056
        %v1058 = vsel %vm409, %v749, 0.0
        %v1059 = vrot.slane %v1058, 4
        %v1060 = vadd.f32 %v1058, %v1059
        %v1061 = vrot.slane %v1060, 2
        %v1062 = vadd.f32 %v1060, %v1061
        %v1063 = vrot.slane %v1062, 1
        %v1064 = vadd.f32 %v1062, %v1063
        %v1065 = vsel %vm409, %v750, 0.0
        %v1066 = vrot.slane %v1065, 4
        %v1067 = vadd.f32 %v1065, %v1066
        %v1068 = vrot.slane %v1067, 2
        %v1069 = vadd.f32 %v1067, %v1068
        %v1070 = vrot.slane %v1069, 1
        %v1071 = vadd.f32 %v1069, %v1070
        %v1072 = vsel %vm409, %v751, 0.0
        %v1073 = vrot.slane %v1072, 4
        %v1074 = vadd.f32 %v1072, %v1073
        %v1075 = vrot.slane %v1074, 2
        %v1076 = vadd.f32 %v1074, %v1075
        %v1077 = vrot.slane %v1076, 1
        %v1078 = vadd.f32 %v1076, %v1077
        %v1079 = vsel %vm409, %v752, 0.0
        %v1080 = vrot.slane %v1079, 4
        %v1081 = vadd.f32 %v1079, %v1080
        %v1082 = vrot.slane %v1081, 2
        %v1083 = vadd.f32 %v1081, %v1082
        %v1084 = vrot.slane %v1083, 1
        %v1085 = vadd.f32 %v1083, %v1084
        %v1086 = vsel %vm409, %v753, 0.0
        %v1087 = vrot.slane %v1086, 4
        %v1088 = vadd.f32 %v1086, %v1087
        %v1089 = vrot.slane %v1088, 2
        %v1090 = vadd.f32 %v1088, %v1089
        %v1091 = vrot.slane %v1090, 1
        %v1092 = vadd.f32 %v1090, %v1091
        %v1093 = vsel %vm409, %v754, 0.0
        %v1094 = vrot.slane %v1093, 4
        %v1095 = vadd.f32 %v1093, %v1094
        %v1096 = vrot.slane %v1095, 2
        %v1097 = vadd.f32 %v1095, %v1096
        %v1098 = vrot.slane %v1097, 1
        %v1099 = vadd.f32 %v1097, %v1098
        %v1100 = vsel %vm409, %v755, 0.0
        %v1101 = vrot.slane %v1100, 4
        %v1102 = vadd.f32 %v1100, %v1101
        %v1103 = vrot.slane %v1102, 2
        %v1104 = vadd.f32 %v1102, %v1103
        %v1105 = vrot.slane %v1104, 1
        %v1106 = vadd.f32 %v1104, %v1105
        %v1107 = vsel %vm409, %v756, 0.0
        %v1108 = vrot.slane %v1107, 4
        %v1109 = vadd.f32 %v1107, %v1108
        %v1110 = vrot.slane %v1109, 2
        %v1111 = vadd.f32 %v1109, %v1110
        %v1112 = vrot.slane %v1111, 1
        %v1113 = vadd.f32 %v1111, %v1112
        %v1114 = vsel %vm409, %v757, 0.0
        %v1115 = vrot.slane %v1114, 4
        %v1116 = vadd.f32 %v1114, %v1115
        %v1117 = vrot.slane %v1116, 2
        %v1118 = vadd.f32 %v1116, %v1117
        %v1119 = vrot.slane %v1118, 1
        %v1120 = vadd.f32 %v1118, %v1119
        %v1121 = vsel %vm409, %v758, 0.0
        %v1122 = vrot.slane %v1121, 4
        %v1123 = vadd.f32 %v1121, %v1122
        %v1124 = vrot.slane %v1123, 2
        %v1125 = vadd.f32 %v1123, %v1124
        %v1126 = vrot.slane %v1125, 1
        %v1127 = vadd.f32 %v1125, %v1126
        %v1128 = vsel %vm409, %v759, 0.0
        %v1129 = vrot.slane %v1128, 4
        %v1130 = vadd.f32 %v1128, %v1129
        %v1131 = vrot.slane %v1130, 2
        %v1132 = vadd.f32 %v1130, %v1131
        %v1133 = vrot.slane %v1132, 1
        %v1134 = vadd.f32 %v1132, %v1133
        %v1135 = vsel %vm409, %v760, 0.0
        %v1136 = vrot.slane %v1135, 4
        %v1137 = vadd.f32 %v1135, %v1136
        %v1138 = vrot.slane %v1137, 2
        %v1139 = vadd.f32 %v1137, %v1138
        %v1140 = vrot.slane %v1139, 1
        %v1141 = vadd.f32 %v1139, %v1140
        %v1142 = vsel %vm409, %v761, 0.0
        %v1143 = vrot.slane %v1142, 4
        %v1144 = vadd.f32 %v1142, %v1143
        %v1145 = vrot.slane %v1144, 2
        %v1146 = vadd.f32 %v1144, %v1145
        %v1147 = vrot.slane %v1146, 1
        %v1148 = vadd.f32 %v1146, %v1147
        %v1149 = vsel %vm409, %v762, 0.0
        %v1150 = vrot.slane %v1149, 4
        %v1151 = vadd.f32 %v1149, %v1150
        %v1152 = vrot.slane %v1151, 2
        %v1153 = vadd.f32 %v1151, %v1152
        %v1154 = vrot.slane %v1153, 1
        %v1155 = vadd.f32 %v1153, %v1154
        %v1156 = vmul.f32 %v1050, %v1027
        %v1157 = vmul.f32 %v1057, %v1027
        %v1158 = vmul.f32 %v1064, %v1027
        %v1159 = vmul.f32 %v1071, %v1027
        %v1160 = vmul.f32 %v1078, %v1027
        %v1161 = vmul.f32 %v1085, %v1027
        %v1162 = vmul.f32 %v1092, %v1027
        %v1163 = vmul.f32 %v1099, %v1027
        %v1164 = vmul.f32 %v1106, %v1027
        %v1165 = vmul.f32 %v1113, %v1027
        %v1166 = vmul.f32 %v1120, %v1027
        %v1167 = vmul.f32 %v1127, %v1027
        %v1168 = vmul.f32 %v1134, %v1027
        %v1169 = vmul.f32 %v1141, %v1027
        %v1170 = vmul.f32 %v1148, %v1027
        %v1171 = vmul.f32 %v1155, %v1027
        %v1172 = vmul.f32 %v1028, %v747
        %v1173 = vmul.f32 %v1029, %v748
        %v1174 = vmul.f32 %v1030, %v749
        %v1175 = vmul.f32 %v1031, %v750
        %v1176 = vmul.f32 %v1032, %v751
        %v1177 = vmul.f32 %v1033, %v752
        %v1178 = vmul.f32 %v1034, %v753
        %v1179 = vmul.f32 %v1035, %v754
        %v1180 = vmul.f32 %v1036, %v755
        %v1181 = vmul.f32 %v1037, %v756
        %v1182 = vmul.f32 %v1038, %v757
        %v1183 = vmul.f32 %v1039, %v758
        %v1184 = vmul.f32 %v1040, %v759
        %v1185 = vmul.f32 %v1041, %v760
        %v1186 = vmul.f32 %v1042, %v761
        %v1187 = vmul.f32 %v1043, %v762
        %v1188 = vsel %vm409, %v1172, 0.0
        %1189 = vadd.xlane.f32.xlu0 %v1188
        %v1190 = vpop.xlane.xlu0 %1189
        %v1191 = vsel %vm409, %v1173, 0.0
        %1192 = vadd.xlane.f32.xlu0 %v1191
        %v1193 = vpop.xlane.xlu0 %1192
        %v1194 = vsel %vm409, %v1174, 0.0
        %1195 = vadd.xlane.f32.xlu0 %v1194
        %v1196 = vpop.xlane.xlu0 %1195
        %v1197 = vsel %vm409, %v1175, 0.0
        %1198 = vadd.xlane.f32.xlu0 %v1197
        %v1199 = vpop.xlane.xlu0 %1198
        %v1200 = vsel %vm409, %v1176, 0.0
        %1201 = vadd.xlane.f32.xlu0 %v1200
        %v1202 = vpop.xlane.xlu0 %1201
        %v1203 = vsel %vm409, %v1177, 0.0
        %1204 = vadd.xlane.f32.xlu0 %v1203
        %v1205 = vpop.xlane.xlu0 %1204
        %v1206 = vsel %vm409, %v1178, 0.0
        %1207 = vadd.xlane.f32.xlu0 %v1206
        %v1208 = vpop.xlane.xlu0 %1207
        %v1209 = vsel %vm409, %v1179, 0.0
        %1210 = vadd.xlane.f32.xlu0 %v1209
        %v1211 = vpop.xlane.xlu0 %1210
        %v1212 = vsel %vm409, %v1180, 0.0
        %1213 = vadd.xlane.f32.xlu0 %v1212
        %v1214 = vpop.xlane.xlu0 %1213
        %v1215 = vsel %vm409, %v1181, 0.0
        %1216 = vadd.xlane.f32.xlu0 %v1215
        %v1217 = vpop.xlane.xlu0 %1216
        %v1218 = vsel %vm409, %v1182, 0.0
        %1219 = vadd.xlane.f32.xlu0 %v1218
        %v1220 = vpop.xlane.xlu0 %1219
        %v1221 = vsel %vm409, %v1183, 0.0
        %1222 = vadd.xlane.f32.xlu0 %v1221
        %v1223 = vpop.xlane.xlu0 %1222
        %v1224 = vsel %vm409, %v1184, 0.0
        %1225 = vadd.xlane.f32.xlu0 %v1224
        %v1226 = vpop.xlane.xlu0 %1225
        %v1227 = vsel %vm409, %v1185, 0.0
        %1228 = vadd.xlane.f32.xlu0 %v1227
        %v1229 = vpop.xlane.xlu0 %1228
        %v1230 = vsel %vm409, %v1186, 0.0
        %1231 = vadd.xlane.f32.xlu0 %v1230
        %v1232 = vpop.xlane.xlu0 %1231
        %v1233 = vsel %vm409, %v1187, 0.0
        %1234 = vadd.xlane.f32.xlu0 %v1233
        %v1235 = vpop.xlane.xlu0 %1234
        %v1236 = vmul.f32 %v853, %v1156
        %v1237 = vmul.f32 %v856, %v1157
        %v1238 = vmul.f32 %v861, %v1158
        %v1239 = vmul.f32 %v864, %v1159
        %v1240 = vmul.f32 %v869, %v1160
        %v1241 = vmul.f32 %v872, %v1161
        %v1242 = vmul.f32 %v877, %v1162
        %v1243 = vmul.f32 %v880, %v1163
        %v1244 = vmul.f32 %v885, %v1164
        %v1245 = vmul.f32 %v888, %v1165
        %v1246 = vmul.f32 %v893, %v1166
        %v1247 = vmul.f32 %v896, %v1167
        %v1248 = vmul.f32 %v901, %v1168
        %v1249 = vmul.f32 %v904, %v1169
        %v1250 = vmul.f32 %v909, %v1170
        %v1251 = vmul.f32 %v912, %v1171
        %v1252 = vsel %vm409, %v1236, 0.0
        %1253 = vadd.xlane.f32.xlu0 %v1252
        %v1254 = vpop.xlane.xlu0 %1253
        %v1255 = vsel %vm409, %v1237, 0.0
        %1256 = vadd.xlane.f32.xlu0 %v1255
        %v1257 = vpop.xlane.xlu0 %1256
        %v1258 = vsel %vm409, %v1238, 0.0
        %1259 = vadd.xlane.f32.xlu0 %v1258
        %v1260 = vpop.xlane.xlu0 %1259
        %v1261 = vsel %vm409, %v1239, 0.0
        %1262 = vadd.xlane.f32.xlu0 %v1261
        %v1263 = vpop.xlane.xlu0 %1262
        %v1264 = vsel %vm409, %v1240, 0.0
        %1265 = vadd.xlane.f32.xlu0 %v1264
        %v1266 = vpop.xlane.xlu0 %1265
        %v1267 = vsel %vm409, %v1241, 0.0
        %1268 = vadd.xlane.f32.xlu0 %v1267
        %v1269 = vpop.xlane.xlu0 %1268
        %v1270 = vsel %vm409, %v1242, 0.0
        %1271 = vadd.xlane.f32.xlu0 %v1270
        %v1272 = vpop.xlane.xlu0 %1271
        %v1273 = vsel %vm409, %v1243, 0.0
        %1274 = vadd.xlane.f32.xlu0 %v1273
        %v1275 = vpop.xlane.xlu0 %1274
        %v1276 = vsel %vm409, %v1244, 0.0
        %1277 = vadd.xlane.f32.xlu0 %v1276
        %v1278 = vpop.xlane.xlu0 %1277
        %v1279 = vsel %vm409, %v1245, 0.0
        %1280 = vadd.xlane.f32.xlu0 %v1279
        %v1281 = vpop.xlane.xlu0 %1280
        %v1282 = vsel %vm409, %v1246, 0.0
        %1283 = vadd.xlane.f32.xlu0 %v1282
        %v1284 = vpop.xlane.xlu0 %1283
        %v1285 = vsel %vm409, %v1247, 0.0
        %1286 = vadd.xlane.f32.xlu0 %v1285
        %v1287 = vpop.xlane.xlu0 %1286
        %v1288 = vsel %vm409, %v1248, 0.0
        %1289 = vadd.xlane.f32.xlu0 %v1288
        %v1290 = vpop.xlane.xlu0 %1289
        %v1291 = vsel %vm409, %v1249, 0.0
        %1292 = vadd.xlane.f32.xlu0 %v1291
        %v1293 = vpop.xlane.xlu0 %1292
        %v1294 = vsel %vm409, %v1250, 0.0
        %1295 = vadd.xlane.f32.xlu0 %v1294
        %v1296 = vpop.xlane.xlu0 %1295
        %v1297 = vsel %vm409, %v1251, 0.0
        %1298 = vadd.xlane.f32.xlu0 %v1297
        %v1299 = vpop.xlane.xlu0 %1298
        %v1300 = vxor.u32 %v1190, 2147483648
        %v1301 = vxor.u32 %v1193, 2147483648
        %v1302 = vxor.u32 %v1196, 2147483648
        %v1303 = vxor.u32 %v1199, 2147483648
        %v1304 = vxor.u32 %v1202, 2147483648
        %v1305 = vxor.u32 %v1205, 2147483648
        %v1306 = vxor.u32 %v1208, 2147483648
        %v1307 = vxor.u32 %v1211, 2147483648
        %v1308 = vxor.u32 %v1214, 2147483648
        %v1309 = vxor.u32 %v1217, 2147483648
        %v1310 = vxor.u32 %v1220, 2147483648
        %v1311 = vxor.u32 %v1223, 2147483648
        %v1312 = vxor.u32 %v1226, 2147483648
        %v1313 = vxor.u32 %v1229, 2147483648
        %v1314 = vxor.u32 %v1232, 2147483648
        %v1315 = vxor.u32 %v1235, 2147483648
        %v1316 = vmul.f32 %v1300, 1.442695
        %v1317 = vpow.pop %v1316
        %v1318 = vmul.f32 %v1301, 1.442695
        %v1319 = vpow.pop %v1318
        %v1320 = vmul.f32 %v1302, 1.442695
        %v1321 = vpow.pop %v1320
        %v1322 = vmul.f32 %v1303, 1.442695
        %v1323 = vpow.pop %v1322
        %v1324 = vmul.f32 %v1304, 1.442695
        %v1325 = vpow.pop %v1324
        %v1326 = vmul.f32 %v1305, 1.442695
        %v1327 = vpow.pop %v1326
        %v1328 = vmul.f32 %v1306, 1.442695
        %v1329 = vpow.pop %v1328
        %v1330 = vmul.f32 %v1307, 1.442695
        %v1331 = vpow.pop %v1330
        %v1332 = vmul.f32 %v1308, 1.442695
        %v1333 = vpow.pop %v1332
        %v1334 = vmul.f32 %v1309, 1.442695
        %v1335 = vpow.pop %v1334
        %v1336 = vmul.f32 %v1310, 1.442695
        %v1337 = vpow.pop %v1336
        %v1338 = vmul.f32 %v1311, 1.442695
        %v1339 = vpow.pop %v1338
        %v1340 = vmul.f32 %v1312, 1.442695
        %v1341 = vpow.pop %v1340
        %v1342 = vmul.f32 %v1313, 1.442695
        %v1343 = vpow.pop %v1342
        %v1344 = vmul.f32 %v1314, 1.442695
        %v1345 = vpow.pop %v1344
        %v1346 = vmul.f32 %v1315, 1.442695
        %v1347 = vpow.pop %v1346
        %v1348 = vadd.f32 %v1317, 1.0
        %v1349 = vadd.f32 %v1319, 1.0
        %v1350 = vadd.f32 %v1321, 1.0
        %v1351 = vadd.f32 %v1323, 1.0
        %v1352 = vadd.f32 %v1325, 1.0
        %v1353 = vadd.f32 %v1327, 1.0
        %v1354 = vadd.f32 %v1329, 1.0
        %v1355 = vadd.f32 %v1331, 1.0
        %v1356 = vadd.f32 %v1333, 1.0
        %v1357 = vadd.f32 %v1335, 1.0
        %v1358 = vadd.f32 %v1337, 1.0
        %v1359 = vadd.f32 %v1339, 1.0
        %v1360 = vadd.f32 %v1341, 1.0
        %v1361 = vadd.f32 %v1343, 1.0
        %v1362 = vadd.f32 %v1345, 1.0
        %v1363 = vadd.f32 %v1347, 1.0
        %v1364 = vrcp.pop %v1348
        %v1365 = vmul.f32 1.0, %v1364
        %v1366 = vrcp.pop %v1349
        %v1367 = vmul.f32 1.0, %v1366
        %v1368 = vrcp.pop %v1350
        %v1369 = vmul.f32 1.0, %v1368
        %v1370 = vrcp.pop %v1351
        %v1371 = vmul.f32 1.0, %v1370
        %v1372 = vrcp.pop %v1352
        %v1373 = vmul.f32 1.0, %v1372
        %v1374 = vrcp.pop %v1353
        %v1375 = vmul.f32 1.0, %v1374
        %v1376 = vrcp.pop %v1354
        %v1377 = vmul.f32 1.0, %v1376
        %v1378 = vrcp.pop %v1355
        %v1379 = vmul.f32 1.0, %v1378
        %v1380 = vrcp.pop %v1356
        %v1381 = vmul.f32 1.0, %v1380
        %v1382 = vrcp.pop %v1357
        %v1383 = vmul.f32 1.0, %v1382
        %v1384 = vrcp.pop %v1358
        %v1385 = vmul.f32 1.0, %v1384
        %v1386 = vrcp.pop %v1359
        %v1387 = vmul.f32 1.0, %v1386
        %v1388 = vrcp.pop %v1360
        %v1389 = vmul.f32 1.0, %v1388
        %v1390 = vrcp.pop %v1361
        %v1391 = vmul.f32 1.0, %v1390
        %v1392 = vrcp.pop %v1362
        %v1393 = vmul.f32 1.0, %v1392
        %v1394 = vrcp.pop %v1363
        %v1395 = vmul.f32 1.0, %v1394
        %v1396 = vxor.u32 %v1254, 2147483648
        %v1397 = vxor.u32 %v1257, 2147483648
        %v1398 = vxor.u32 %v1260, 2147483648
        %v1399 = vxor.u32 %v1263, 2147483648
        %v1400 = vxor.u32 %v1266, 2147483648
        %v1401 = vxor.u32 %v1269, 2147483648
        %v1402 = vxor.u32 %v1272, 2147483648
        %v1403 = vxor.u32 %v1275, 2147483648
        %v1404 = vxor.u32 %v1278, 2147483648
        %v1405 = vxor.u32 %v1281, 2147483648
        %v1406 = vxor.u32 %v1284, 2147483648
        %v1407 = vxor.u32 %v1287, 2147483648
        %v1408 = vxor.u32 %v1290, 2147483648
        %v1409 = vxor.u32 %v1293, 2147483648
        %v1410 = vxor.u32 %v1296, 2147483648
        %v1411 = vxor.u32 %v1299, 2147483648
        %v1412 = vmul.f32 %v1396, 1.442695
        %v1413 = vpow.pop %v1412
        %v1414 = vmul.f32 %v1397, 1.442695
        %v1415 = vpow.pop %v1414
        %v1416 = vmul.f32 %v1398, 1.442695
        %v1417 = vpow.pop %v1416
        %v1418 = vmul.f32 %v1399, 1.442695
        %v1419 = vpow.pop %v1418
        %v1420 = vmul.f32 %v1400, 1.442695
        %v1421 = vpow.pop %v1420
        %v1422 = vmul.f32 %v1401, 1.442695
        %v1423 = vpow.pop %v1422
        %v1424 = vmul.f32 %v1402, 1.442695
        %v1425 = vpow.pop %v1424
        %v1426 = vmul.f32 %v1403, 1.442695
        %v1427 = vpow.pop %v1426
        %v1428 = vmul.f32 %v1404, 1.442695
        %v1429 = vpow.pop %v1428
        %v1430 = vmul.f32 %v1405, 1.442695
        %v1431 = vpow.pop %v1430
        %v1432 = vmul.f32 %v1406, 1.442695
        %v1433 = vpow.pop %v1432
        %v1434 = vmul.f32 %v1407, 1.442695
        %v1435 = vpow.pop %v1434
        %v1436 = vmul.f32 %v1408, 1.442695
        %v1437 = vpow.pop %v1436
        %v1438 = vmul.f32 %v1409, 1.442695
        %v1439 = vpow.pop %v1438
        %v1440 = vmul.f32 %v1410, 1.442695
        %v1441 = vpow.pop %v1440
        %v1442 = vmul.f32 %v1411, 1.442695
        %v1443 = vpow.pop %v1442
        %v1444 = vadd.f32 %v1413, 1.0
        %v1445 = vadd.f32 %v1415, 1.0
        %v1446 = vadd.f32 %v1417, 1.0
        %v1447 = vadd.f32 %v1419, 1.0
        %v1448 = vadd.f32 %v1421, 1.0
        %v1449 = vadd.f32 %v1423, 1.0
        %v1450 = vadd.f32 %v1425, 1.0
        %v1451 = vadd.f32 %v1427, 1.0
        %v1452 = vadd.f32 %v1429, 1.0
        %v1453 = vadd.f32 %v1431, 1.0
        %v1454 = vadd.f32 %v1433, 1.0
        %v1455 = vadd.f32 %v1435, 1.0
        %v1456 = vadd.f32 %v1437, 1.0
        %v1457 = vadd.f32 %v1439, 1.0
        %v1458 = vadd.f32 %v1441, 1.0
        %v1459 = vadd.f32 %v1443, 1.0
        %v1460 = vrcp.pop %v1444
        %v1461 = vmul.f32 1.0, %v1460
        %v1462 = vrcp.pop %v1445
        %v1463 = vmul.f32 1.0, %v1462
        %v1464 = vrcp.pop %v1446
        %v1465 = vmul.f32 1.0, %v1464
        %v1466 = vrcp.pop %v1447
        %v1467 = vmul.f32 1.0, %v1466
        %v1468 = vrcp.pop %v1448
        %v1469 = vmul.f32 1.0, %v1468
        %v1470 = vrcp.pop %v1449
        %v1471 = vmul.f32 1.0, %v1470
        %v1472 = vrcp.pop %v1450
        %v1473 = vmul.f32 1.0, %v1472
        %v1474 = vrcp.pop %v1451
        %v1475 = vmul.f32 1.0, %v1474
        %v1476 = vrcp.pop %v1452
        %v1477 = vmul.f32 1.0, %v1476
        %v1478 = vrcp.pop %v1453
        %v1479 = vmul.f32 1.0, %v1478
        %v1480 = vrcp.pop %v1454
        %v1481 = vmul.f32 1.0, %v1480
        %v1482 = vrcp.pop %v1455
        %v1483 = vmul.f32 1.0, %v1482
        %v1484 = vrcp.pop %v1456
        %v1485 = vmul.f32 1.0, %v1484
        %v1486 = vrcp.pop %v1457
        %v1487 = vmul.f32 1.0, %v1486
        %v1488 = vrcp.pop %v1458
        %v1489 = vmul.f32 1.0, %v1488
        %v1490 = vrcp.pop %v1459
        %v1491 = vmul.f32 1.0, %v1490
        %v1508 = vlaneseq
        %v1509 = vand.u32 %v1508, 127
        %v1510 = vlaneseq
        %v1511 = vshrl.u32 %v1510, 7
        %v1512 = vsub.s32 %v1509, %v1511
        %v1513 = vrot.slane %v1365, %v1512
        %v1514 = vlaneseq
        %v1515 = vshrl.u32 %v1514, 7
        %v1516 = vsub.s32 %v1509, %v1515
        %v1517 = vrot.slane %v1367, %v1516
        %v1518 = vlaneseq
        %v1519 = vshrl.u32 %v1518, 7
        %v1520 = vsub.s32 %v1509, %v1519
        %v1521 = vrot.slane %v1369, %v1520
        %v1522 = vlaneseq
        %v1523 = vshrl.u32 %v1522, 7
        %v1524 = vsub.s32 %v1509, %v1523
        %v1525 = vrot.slane %v1371, %v1524
        %v1526 = vlaneseq
        %v1527 = vshrl.u32 %v1526, 7
        %v1528 = vsub.s32 %v1509, %v1527
        %v1529 = vrot.slane %v1373, %v1528
        %v1530 = vlaneseq
        %v1531 = vshrl.u32 %v1530, 7
        %v1532 = vsub.s32 %v1509, %v1531
        %v1533 = vrot.slane %v1375, %v1532
        %v1534 = vlaneseq
        %v1535 = vshrl.u32 %v1534, 7
        %v1536 = vsub.s32 %v1509, %v1535
        %v1537 = vrot.slane %v1377, %v1536
        %v1538 = vlaneseq
        %v1539 = vshrl.u32 %v1538, 7
        %v1540 = vsub.s32 %v1509, %v1539
        %v1541 = vrot.slane %v1379, %v1540
        %v1542 = vlaneseq
        %v1543 = vshrl.u32 %v1542, 7
        %v1544 = vsub.s32 %v1509, %v1543
        %v1545 = vrot.slane %v1381, %v1544
        %v1546 = vlaneseq
        %v1547 = vshrl.u32 %v1546, 7
        %v1548 = vsub.s32 %v1509, %v1547
        %v1549 = vrot.slane %v1383, %v1548
        %v1550 = vlaneseq
        %v1551 = vshrl.u32 %v1550, 7
        %v1552 = vsub.s32 %v1509, %v1551
        %v1553 = vrot.slane %v1385, %v1552
        %v1554 = vlaneseq
        %v1555 = vshrl.u32 %v1554, 7
        %v1556 = vsub.s32 %v1509, %v1555
        %v1557 = vrot.slane %v1387, %v1556
        %v1558 = vlaneseq
        %v1559 = vshrl.u32 %v1558, 7
        %v1560 = vsub.s32 %v1509, %v1559
        %v1561 = vrot.slane %v1389, %v1560
        %v1562 = vlaneseq
        %v1563 = vshrl.u32 %v1562, 7
        %v1564 = vsub.s32 %v1509, %v1563
        %v1565 = vrot.slane %v1391, %v1564
        %v1566 = vlaneseq
        %v1567 = vshrl.u32 %v1566, 7
        %v1568 = vsub.s32 %v1509, %v1567
        %v1569 = vrot.slane %v1393, %v1568
        %v1570 = vlaneseq
        %v1571 = vshrl.u32 %v1570, 7
        %v1572 = vsub.s32 %v1509, %v1571
        %v1573 = vrot.slane %v1395, %v1572
        %vm1574 = vcmask 1041409
        %v1575 = vsel %vm1574, %v1517, %v1513
        %vm1576 = vcmask 1042434
        %v1577 = vsel %vm1576, %v1521, %v1575
        %vm1578 = vcmask 1043459
        %v1579 = vsel %vm1578, %v1525, %v1577
        %vm1580 = vcmask 1044484
        %v1581 = vsel %vm1580, %v1529, %v1579
        %vm1582 = vcmask 1045509
        %v1583 = vsel %vm1582, %v1533, %v1581
        %vm1584 = vcmask 1046534
        %v1585 = vsel %vm1584, %v1537, %v1583
        %vm1586 = vcmask 1047559
        %v1587 = vsel %vm1586, %v1541, %v1585
        %v1588 = vsel %vm1574, %v1549, %v1545
        %v1589 = vsel %vm1576, %v1553, %v1588
        %v1590 = vsel %vm1578, %v1557, %v1589
        %v1591 = vsel %vm1580, %v1561, %v1590
        %v1592 = vsel %vm1582, %v1565, %v1591
        %v1593 = vsel %vm1584, %v1569, %v1592
        %v1594 = vsel %vm1586, %v1573, %v1593
        %vm1597 = vcmask 64512
        %v1598 = vsel %vm1597, %v1587, -inf
        %1599 = vmax.xlane.f32.xlu0 %v1598
        %v1600 = vpop.xlane.xlu0 %1599
        %v1601 = vsel %vm1597, %v1594, -inf
        %1602 = vmax.xlane.f32.xlu0 %v1601
        %v1603 = vpop.xlane.xlu0 %1602
        %v1606 = vlaneseq
        %v1607 = vshrl.u32 %v1606, 7
        %v1608 = vsub.s32 0, %v1607
        %v1609 = vrot.slane %v1600, %v1608
        %v1610 = vlaneseq
        %v1611 = vshrl.u32 %v1610, 7
        %v1612 = vsub.s32 1, %v1611
        %v1613 = vrot.slane %v1600, %v1612
        %v1614 = vlaneseq
        %v1615 = vshrl.u32 %v1614, 7
        %v1616 = vsub.s32 2, %v1615
        %v1617 = vrot.slane %v1600, %v1616
        %v1618 = vlaneseq
        %v1619 = vshrl.u32 %v1618, 7
        %v1620 = vsub.s32 3, %v1619
        %v1621 = vrot.slane %v1600, %v1620
        %v1622 = vlaneseq
        %v1623 = vshrl.u32 %v1622, 7
        %v1624 = vsub.s32 4, %v1623
        %v1625 = vrot.slane %v1600, %v1624
        %v1626 = vlaneseq
        %v1627 = vshrl.u32 %v1626, 7
        %v1628 = vsub.s32 5, %v1627
        %v1629 = vrot.slane %v1600, %v1628
        %v1630 = vlaneseq
        %v1631 = vshrl.u32 %v1630, 7
        %v1632 = vsub.s32 6, %v1631
        %v1633 = vrot.slane %v1600, %v1632
        %v1634 = vlaneseq
        %v1635 = vshrl.u32 %v1634, 7
        %v1636 = vsub.s32 7, %v1635
        %v1637 = vrot.slane %v1600, %v1636
        %v1638 = vlaneseq
        %v1639 = vshrl.u32 %v1638, 7
        %v1640 = vsub.s32 0, %v1639
        %v1641 = vrot.slane %v1603, %v1640
        %v1642 = vlaneseq
        %v1643 = vshrl.u32 %v1642, 7
        %v1644 = vsub.s32 1, %v1643
        %v1645 = vrot.slane %v1603, %v1644
        %v1646 = vlaneseq
        %v1647 = vshrl.u32 %v1646, 7
        %v1648 = vsub.s32 2, %v1647
        %v1649 = vrot.slane %v1603, %v1648
        %v1650 = vlaneseq
        %v1651 = vshrl.u32 %v1650, 7
        %v1652 = vsub.s32 3, %v1651
        %v1653 = vrot.slane %v1603, %v1652
        %v1654 = vlaneseq
        %v1655 = vshrl.u32 %v1654, 7
        %v1656 = vsub.s32 4, %v1655
        %v1657 = vrot.slane %v1603, %v1656
        %v1658 = vlaneseq
        %v1659 = vshrl.u32 %v1658, 7
        %v1660 = vsub.s32 5, %v1659
        %v1661 = vrot.slane %v1603, %v1660
        %v1662 = vlaneseq
        %v1663 = vshrl.u32 %v1662, 7
        %v1664 = vsub.s32 6, %v1663
        %v1665 = vrot.slane %v1603, %v1664
        %v1666 = vlaneseq
        %v1667 = vshrl.u32 %v1666, 7
        %v1668 = vsub.s32 7, %v1667
        %v1669 = vrot.slane %v1603, %v1668
        %v1686 = vsub.f32 %v1365, %v1609
        %v1687 = vsub.f32 %v1367, %v1613
        %v1688 = vsub.f32 %v1369, %v1617
        %v1689 = vsub.f32 %v1371, %v1621
        %v1690 = vsub.f32 %v1373, %v1625
        %v1691 = vsub.f32 %v1375, %v1629
        %v1692 = vsub.f32 %v1377, %v1633
        %v1693 = vsub.f32 %v1379, %v1637
        %v1694 = vsub.f32 %v1381, %v1641
        %v1695 = vsub.f32 %v1383, %v1645
        %v1696 = vsub.f32 %v1385, %v1649
        %v1697 = vsub.f32 %v1387, %v1653
        %v1698 = vsub.f32 %v1389, %v1657
        %v1699 = vsub.f32 %v1391, %v1661
        %v1700 = vsub.f32 %v1393, %v1665
        %v1701 = vsub.f32 %v1395, %v1669
        %v1702 = vmul.f32 %v1686, 1.442695
        %v1703 = vpow.pop %v1702
        %v1704 = vmul.f32 %v1687, 1.442695
        %v1705 = vpow.pop %v1704
        %v1706 = vmul.f32 %v1688, 1.442695
        %v1707 = vpow.pop %v1706
        %v1708 = vmul.f32 %v1689, 1.442695
        %v1709 = vpow.pop %v1708
        %v1710 = vmul.f32 %v1690, 1.442695
        %v1711 = vpow.pop %v1710
        %v1712 = vmul.f32 %v1691, 1.442695
        %v1713 = vpow.pop %v1712
        %v1714 = vmul.f32 %v1692, 1.442695
        %v1715 = vpow.pop %v1714
        %v1716 = vmul.f32 %v1693, 1.442695
        %v1717 = vpow.pop %v1716
        %v1718 = vmul.f32 %v1694, 1.442695
        %v1719 = vpow.pop %v1718
        %v1720 = vmul.f32 %v1695, 1.442695
        %v1721 = vpow.pop %v1720
        %v1722 = vmul.f32 %v1696, 1.442695
        %v1723 = vpow.pop %v1722
        %v1724 = vmul.f32 %v1697, 1.442695
        %v1725 = vpow.pop %v1724
        %v1726 = vmul.f32 %v1698, 1.442695
        %v1727 = vpow.pop %v1726
        %v1728 = vmul.f32 %v1699, 1.442695
        %v1729 = vpow.pop %v1728
        %v1730 = vmul.f32 %v1700, 1.442695
        %v1731 = vpow.pop %v1730
        %v1732 = vmul.f32 %v1701, 1.442695
        %v1733 = vpow.pop %v1732
        %1750 = vset.pattern.permute.xlu0 0
        %1751 = vperm.xlu0 %1750, %v1703
        %v1752 = vpop.permute.xlu0 %1751
        %1753 = vset.pattern.permute.xlu0 0
        %1754 = vperm.xlu0 %1753, %v1705
        %v1755 = vpop.permute.xlu0 %1754
        %1756 = vset.pattern.permute.xlu0 0
        %1757 = vperm.xlu0 %1756, %v1707
        %v1758 = vpop.permute.xlu0 %1757
        %1759 = vset.pattern.permute.xlu0 0
        %1760 = vperm.xlu0 %1759, %v1709
        %v1761 = vpop.permute.xlu0 %1760
        %1762 = vset.pattern.permute.xlu0 0
        %1763 = vperm.xlu0 %1762, %v1711
        %v1764 = vpop.permute.xlu0 %1763
        %1765 = vset.pattern.permute.xlu0 0
        %1766 = vperm.xlu0 %1765, %v1713
        %v1767 = vpop.permute.xlu0 %1766
        %1768 = vset.pattern.permute.xlu0 0
        %1769 = vperm.xlu0 %1768, %v1715
        %v1770 = vpop.permute.xlu0 %1769
        %1771 = vset.pattern.permute.xlu0 0
        %1772 = vperm.xlu0 %1771, %v1717
        %v1773 = vpop.permute.xlu0 %1772
        %1774 = vset.pattern.permute.xlu0 0
        %1775 = vperm.xlu0 %1774, %v1719
        %v1776 = vpop.permute.xlu0 %1775
        %1777 = vset.pattern.permute.xlu0 0
        %1778 = vperm.xlu0 %1777, %v1721
        %v1779 = vpop.permute.xlu0 %1778
        %1780 = vset.pattern.permute.xlu0 0
        %1781 = vperm.xlu0 %1780, %v1723
        %v1782 = vpop.permute.xlu0 %1781
        %1783 = vset.pattern.permute.xlu0 0
        %1784 = vperm.xlu0 %1783, %v1725
        %v1785 = vpop.permute.xlu0 %1784
        %1786 = vset.pattern.permute.xlu0 0
        %1787 = vperm.xlu0 %1786, %v1727
        %v1788 = vpop.permute.xlu0 %1787
        %1789 = vset.pattern.permute.xlu0 0
        %1790 = vperm.xlu0 %1789, %v1729
        %v1791 = vpop.permute.xlu0 %1790
        %1792 = vset.pattern.permute.xlu0 0
        %1793 = vperm.xlu0 %1792, %v1731
        %v1794 = vpop.permute.xlu0 %1793
        %1795 = vset.pattern.permute.xlu0 0
        %1796 = vperm.xlu0 %1795, %v1733
        %v1797 = vpop.permute.xlu0 %1796
        %v1798 = vlaneseq
        %v1799 = vshrl.u32 %v1798, 7
        %v1800 = vsub.s32 %v1509, %v1799
        %v1801 = vrot.slane %v1752, %v1800
        %v1802 = vlaneseq
        %v1803 = vshrl.u32 %v1802, 7
        %v1804 = vsub.s32 %v1509, %v1803
        %v1805 = vrot.slane %v1755, %v1804
        %v1806 = vlaneseq
        %v1807 = vshrl.u32 %v1806, 7
        %v1808 = vsub.s32 %v1509, %v1807
        %v1809 = vrot.slane %v1758, %v1808
        %v1810 = vlaneseq
        %v1811 = vshrl.u32 %v1810, 7
        %v1812 = vsub.s32 %v1509, %v1811
        %v1813 = vrot.slane %v1761, %v1812
        %v1814 = vlaneseq
        %v1815 = vshrl.u32 %v1814, 7
        %v1816 = vsub.s32 %v1509, %v1815
        %v1817 = vrot.slane %v1764, %v1816
        %v1818 = vlaneseq
        %v1819 = vshrl.u32 %v1818, 7
        %v1820 = vsub.s32 %v1509, %v1819
        %v1821 = vrot.slane %v1767, %v1820
        %v1822 = vlaneseq
        %v1823 = vshrl.u32 %v1822, 7
        %v1824 = vsub.s32 %v1509, %v1823
        %v1825 = vrot.slane %v1770, %v1824
        %v1826 = vlaneseq
        %v1827 = vshrl.u32 %v1826, 7
        %v1828 = vsub.s32 %v1509, %v1827
        %v1829 = vrot.slane %v1773, %v1828
        %v1830 = vlaneseq
        %v1831 = vshrl.u32 %v1830, 7
        %v1832 = vsub.s32 %v1509, %v1831
        %v1833 = vrot.slane %v1776, %v1832
        %v1834 = vlaneseq
        %v1835 = vshrl.u32 %v1834, 7
        %v1836 = vsub.s32 %v1509, %v1835
        %v1837 = vrot.slane %v1779, %v1836
        %v1838 = vlaneseq
        %v1839 = vshrl.u32 %v1838, 7
        %v1840 = vsub.s32 %v1509, %v1839
        %v1841 = vrot.slane %v1782, %v1840
        %v1842 = vlaneseq
        %v1843 = vshrl.u32 %v1842, 7
        %v1844 = vsub.s32 %v1509, %v1843
        %v1845 = vrot.slane %v1785, %v1844
        %v1846 = vlaneseq
        %v1847 = vshrl.u32 %v1846, 7
        %v1848 = vsub.s32 %v1509, %v1847
        %v1849 = vrot.slane %v1788, %v1848
        %v1850 = vlaneseq
        %v1851 = vshrl.u32 %v1850, 7
        %v1852 = vsub.s32 %v1509, %v1851
        %v1853 = vrot.slane %v1791, %v1852
        %v1854 = vlaneseq
        %v1855 = vshrl.u32 %v1854, 7
        %v1856 = vsub.s32 %v1509, %v1855
        %v1857 = vrot.slane %v1794, %v1856
        %v1858 = vlaneseq
        %v1859 = vshrl.u32 %v1858, 7
        %v1860 = vsub.s32 %v1509, %v1859
        %v1861 = vrot.slane %v1797, %v1860
        %v1862 = vsel %vm1574, %v1805, %v1801
        %v1863 = vsel %vm1576, %v1809, %v1862
        %v1864 = vsel %vm1578, %v1813, %v1863
        %v1865 = vsel %vm1580, %v1817, %v1864
        %v1866 = vsel %vm1582, %v1821, %v1865
        %v1867 = vsel %vm1584, %v1825, %v1866
        %v1868 = vsel %vm1586, %v1829, %v1867
        %v1869 = vsel %vm1574, %v1837, %v1833
        %v1870 = vsel %vm1576, %v1841, %v1869
        %v1871 = vsel %vm1578, %v1845, %v1870
        %v1872 = vsel %vm1580, %v1849, %v1871
        %v1873 = vsel %vm1582, %v1853, %v1872
        %v1874 = vsel %vm1584, %v1857, %v1873
        %v1875 = vsel %vm1586, %v1861, %v1874
        %v1878 = vsel %vm1597, %v1868, 0.0
        %1879 = vadd.xlane.f32.xlu0 %v1878
        %v1880 = vpop.xlane.xlu0 %1879
        %v1881 = vsel %vm1597, %v1875, 0.0
        %1882 = vadd.xlane.f32.xlu0 %v1881
        %v1883 = vpop.xlane.xlu0 %1882
        %v1886 = vlaneseq
        %v1887 = vshrl.u32 %v1886, 7
        %v1888 = vsub.s32 0, %v1887
        %v1889 = vrot.slane %v1880, %v1888
        %v1890 = vlaneseq
        %v1891 = vshrl.u32 %v1890, 7
        %v1892 = vsub.s32 1, %v1891
        %v1893 = vrot.slane %v1880, %v1892
        %v1894 = vlaneseq
        %v1895 = vshrl.u32 %v1894, 7
        %v1896 = vsub.s32 2, %v1895
        %v1897 = vrot.slane %v1880, %v1896
        %v1898 = vlaneseq
        %v1899 = vshrl.u32 %v1898, 7
        %v1900 = vsub.s32 3, %v1899
        %v1901 = vrot.slane %v1880, %v1900
        %v1902 = vlaneseq
        %v1903 = vshrl.u32 %v1902, 7
        %v1904 = vsub.s32 4, %v1903
        %v1905 = vrot.slane %v1880, %v1904
        %v1906 = vlaneseq
        %v1907 = vshrl.u32 %v1906, 7
        %v1908 = vsub.s32 5, %v1907
        %v1909 = vrot.slane %v1880, %v1908
        %v1910 = vlaneseq
        %v1911 = vshrl.u32 %v1910, 7
        %v1912 = vsub.s32 6, %v1911
        %v1913 = vrot.slane %v1880, %v1912
        %v1914 = vlaneseq
        %v1915 = vshrl.u32 %v1914, 7
        %v1916 = vsub.s32 7, %v1915
        %v1917 = vrot.slane %v1880, %v1916
        %v1918 = vlaneseq
        %v1919 = vshrl.u32 %v1918, 7
        %v1920 = vsub.s32 0, %v1919
        %v1921 = vrot.slane %v1883, %v1920
        %v1922 = vlaneseq
        %v1923 = vshrl.u32 %v1922, 7
        %v1924 = vsub.s32 1, %v1923
        %v1925 = vrot.slane %v1883, %v1924
        %v1926 = vlaneseq
        %v1927 = vshrl.u32 %v1926, 7
        %v1928 = vsub.s32 2, %v1927
        %v1929 = vrot.slane %v1883, %v1928
        %v1930 = vlaneseq
        %v1931 = vshrl.u32 %v1930, 7
        %v1932 = vsub.s32 3, %v1931
        %v1933 = vrot.slane %v1883, %v1932
        %v1934 = vlaneseq
        %v1935 = vshrl.u32 %v1934, 7
        %v1936 = vsub.s32 4, %v1935
        %v1937 = vrot.slane %v1883, %v1936
        %v1938 = vlaneseq
        %v1939 = vshrl.u32 %v1938, 7
        %v1940 = vsub.s32 5, %v1939
        %v1941 = vrot.slane %v1883, %v1940
        %v1942 = vlaneseq
        %v1943 = vshrl.u32 %v1942, 7
        %v1944 = vsub.s32 6, %v1943
        %v1945 = vrot.slane %v1883, %v1944
        %v1946 = vlaneseq
        %v1947 = vshrl.u32 %v1946, 7
        %v1948 = vsub.s32 7, %v1947
        %v1949 = vrot.slane %v1883, %v1948
        %v1966 = vrcp.pop %v1889
        %v1967 = vmul.f32 %v1703, %v1966
        %v1968 = vrcp.pop %v1893
        %v1969 = vmul.f32 %v1705, %v1968
        %v1970 = vrcp.pop %v1897
        %v1971 = vmul.f32 %v1707, %v1970
        %v1972 = vrcp.pop %v1901
        %v1973 = vmul.f32 %v1709, %v1972
        %v1974 = vrcp.pop %v1905
        %v1975 = vmul.f32 %v1711, %v1974
        %v1976 = vrcp.pop %v1909
        %v1977 = vmul.f32 %v1713, %v1976
        %v1978 = vrcp.pop %v1913
        %v1979 = vmul.f32 %v1715, %v1978
        %v1980 = vrcp.pop %v1917
        %v1981 = vmul.f32 %v1717, %v1980
        %v1982 = vrcp.pop %v1921
        %v1983 = vmul.f32 %v1719, %v1982
        %v1984 = vrcp.pop %v1925
        %v1985 = vmul.f32 %v1721, %v1984
        %v1986 = vrcp.pop %v1929
        %v1987 = vmul.f32 %v1723, %v1986
        %v1988 = vrcp.pop %v1933
        %v1989 = vmul.f32 %v1725, %v1988
        %v1990 = vrcp.pop %v1937
        %v1991 = vmul.f32 %v1727, %v1990
        %v1992 = vrcp.pop %v1941
        %v1993 = vmul.f32 %v1729, %v1992
        %v1994 = vrcp.pop %v1945
        %v1995 = vmul.f32 %v1731, %v1994
        %v1996 = vrcp.pop %v1949
        %v1997 = vmul.f32 %v1733, %v1996
        %v2014 = vlaneseq
        %v2015 = vshrl.u32 %v2014, 7
        %v2016 = vsub.s32 %v1509, %v2015
        %v2017 = vrot.slane %v1461, %v2016
        %v2018 = vlaneseq
        %v2019 = vshrl.u32 %v2018, 7
        %v2020 = vsub.s32 %v1509, %v2019
        %v2021 = vrot.slane %v1463, %v2020
        %v2022 = vlaneseq
        %v2023 = vshrl.u32 %v2022, 7
        %v2024 = vsub.s32 %v1509, %v2023
        %v2025 = vrot.slane %v1465, %v2024
        %v2026 = vlaneseq
        %v2027 = vshrl.u32 %v2026, 7
        %v2028 = vsub.s32 %v1509, %v2027
        %v2029 = vrot.slane %v1467, %v2028
        %v2030 = vlaneseq
        %v2031 = vshrl.u32 %v2030, 7
        %v2032 = vsub.s32 %v1509, %v2031
        %v2033 = vrot.slane %v1469, %v2032
        %v2034 = vlaneseq
        %v2035 = vshrl.u32 %v2034, 7
        %v2036 = vsub.s32 %v1509, %v2035
        %v2037 = vrot.slane %v1471, %v2036
        %v2038 = vlaneseq
        %v2039 = vshrl.u32 %v2038, 7
        %v2040 = vsub.s32 %v1509, %v2039
        %v2041 = vrot.slane %v1473, %v2040
        %v2042 = vlaneseq
        %v2043 = vshrl.u32 %v2042, 7
        %v2044 = vsub.s32 %v1509, %v2043
        %v2045 = vrot.slane %v1475, %v2044
        %v2046 = vlaneseq
        %v2047 = vshrl.u32 %v2046, 7
        %v2048 = vsub.s32 %v1509, %v2047
        %v2049 = vrot.slane %v1477, %v2048
        %v2050 = vlaneseq
        %v2051 = vshrl.u32 %v2050, 7
        %v2052 = vsub.s32 %v1509, %v2051
        %v2053 = vrot.slane %v1479, %v2052
        %v2054 = vlaneseq
        %v2055 = vshrl.u32 %v2054, 7
        %v2056 = vsub.s32 %v1509, %v2055
        %v2057 = vrot.slane %v1481, %v2056
        %v2058 = vlaneseq
        %v2059 = vshrl.u32 %v2058, 7
        %v2060 = vsub.s32 %v1509, %v2059
        %v2061 = vrot.slane %v1483, %v2060
        %v2062 = vlaneseq
        %v2063 = vshrl.u32 %v2062, 7
        %v2064 = vsub.s32 %v1509, %v2063
        %v2065 = vrot.slane %v1485, %v2064
        %v2066 = vlaneseq
        %v2067 = vshrl.u32 %v2066, 7
        %v2068 = vsub.s32 %v1509, %v2067
        %v2069 = vrot.slane %v1487, %v2068
        %v2070 = vlaneseq
        %v2071 = vshrl.u32 %v2070, 7
        %v2072 = vsub.s32 %v1509, %v2071
        %v2073 = vrot.slane %v1489, %v2072
        %v2074 = vlaneseq
        %v2075 = vshrl.u32 %v2074, 7
        %v2076 = vsub.s32 %v1509, %v2075
        %v2077 = vrot.slane %v1491, %v2076
        %v2078 = vsel %vm1574, %v2021, %v2017
        %v2079 = vsel %vm1576, %v2025, %v2078
        %v2080 = vsel %vm1578, %v2029, %v2079
        %v2081 = vsel %vm1580, %v2033, %v2080
        %v2082 = vsel %vm1582, %v2037, %v2081
        %v2083 = vsel %vm1584, %v2041, %v2082
        %v2084 = vsel %vm1586, %v2045, %v2083
        %v2085 = vsel %vm1574, %v2053, %v2049
        %v2086 = vsel %vm1576, %v2057, %v2085
        %v2087 = vsel %vm1578, %v2061, %v2086
        %v2088 = vsel %vm1580, %v2065, %v2087
        %v2089 = vsel %vm1582, %v2069, %v2088
        %v2090 = vsel %vm1584, %v2073, %v2089
        %v2091 = vsel %vm1586, %v2077, %v2090
        %v2094 = vsel %vm1597, %v2084, -inf
        %2095 = vmax.xlane.f32.xlu0 %v2094
        %v2096 = vpop.xlane.xlu0 %2095
        %v2097 = vsel %vm1597, %v2091, -inf
        %2098 = vmax.xlane.f32.xlu0 %v2097
        %v2099 = vpop.xlane.xlu0 %2098
        %v2102 = vlaneseq
        %v2103 = vshrl.u32 %v2102, 7
        %v2104 = vsub.s32 0, %v2103
        %v2105 = vrot.slane %v2096, %v2104
        %v2106 = vlaneseq
        %v2107 = vshrl.u32 %v2106, 7
        %v2108 = vsub.s32 1, %v2107
        %v2109 = vrot.slane %v2096, %v2108
        %v2110 = vlaneseq
        %v2111 = vshrl.u32 %v2110, 7
        %v2112 = vsub.s32 2, %v2111
        %v2113 = vrot.slane %v2096, %v2112
        %v2114 = vlaneseq
        %v2115 = vshrl.u32 %v2114, 7
        %v2116 = vsub.s32 3, %v2115
        %v2117 = vrot.slane %v2096, %v2116
        %v2118 = vlaneseq
        %v2119 = vshrl.u32 %v2118, 7
        %v2120 = vsub.s32 4, %v2119
        %v2121 = vrot.slane %v2096, %v2120
        %v2122 = vlaneseq
        %v2123 = vshrl.u32 %v2122, 7
        %v2124 = vsub.s32 5, %v2123
        %v2125 = vrot.slane %v2096, %v2124
        %v2126 = vlaneseq
        %v2127 = vshrl.u32 %v2126, 7
        %v2128 = vsub.s32 6, %v2127
        %v2129 = vrot.slane %v2096, %v2128
        %v2130 = vlaneseq
        %v2131 = vshrl.u32 %v2130, 7
        %v2132 = vsub.s32 7, %v2131
        %v2133 = vrot.slane %v2096, %v2132
        %v2134 = vlaneseq
        %v2135 = vshrl.u32 %v2134, 7
        %v2136 = vsub.s32 0, %v2135
        %v2137 = vrot.slane %v2099, %v2136
        %v2138 = vlaneseq
        %v2139 = vshrl.u32 %v2138, 7
        %v2140 = vsub.s32 1, %v2139
        %v2141 = vrot.slane %v2099, %v2140
        %v2142 = vlaneseq
        %v2143 = vshrl.u32 %v2142, 7
        %v2144 = vsub.s32 2, %v2143
        %v2145 = vrot.slane %v2099, %v2144
        %v2146 = vlaneseq
        %v2147 = vshrl.u32 %v2146, 7
        %v2148 = vsub.s32 3, %v2147
        %v2149 = vrot.slane %v2099, %v2148
        %v2150 = vlaneseq
        %v2151 = vshrl.u32 %v2150, 7
        %v2152 = vsub.s32 4, %v2151
        %v2153 = vrot.slane %v2099, %v2152
        %v2154 = vlaneseq
        %v2155 = vshrl.u32 %v2154, 7
        %v2156 = vsub.s32 5, %v2155
        %v2157 = vrot.slane %v2099, %v2156
        %v2158 = vlaneseq
        %v2159 = vshrl.u32 %v2158, 7
        %v2160 = vsub.s32 6, %v2159
        %v2161 = vrot.slane %v2099, %v2160
        %v2162 = vlaneseq
        %v2163 = vshrl.u32 %v2162, 7
        %v2164 = vsub.s32 7, %v2163
        %v2165 = vrot.slane %v2099, %v2164
        %v2182 = vsub.f32 %v1461, %v2105
        %v2183 = vsub.f32 %v1463, %v2109
        %v2184 = vsub.f32 %v1465, %v2113
        %v2185 = vsub.f32 %v1467, %v2117
        %v2186 = vsub.f32 %v1469, %v2121
        %v2187 = vsub.f32 %v1471, %v2125
        %v2188 = vsub.f32 %v1473, %v2129
        %v2189 = vsub.f32 %v1475, %v2133
        %v2190 = vsub.f32 %v1477, %v2137
        %v2191 = vsub.f32 %v1479, %v2141
        %v2192 = vsub.f32 %v1481, %v2145
        %v2193 = vsub.f32 %v1483, %v2149
        %v2194 = vsub.f32 %v1485, %v2153
        %v2195 = vsub.f32 %v1487, %v2157
        %v2196 = vsub.f32 %v1489, %v2161
        %v2197 = vsub.f32 %v1491, %v2165
        %v2198 = vmul.f32 %v2182, 1.442695
        %v2199 = vpow.pop %v2198
        %v2200 = vmul.f32 %v2183, 1.442695
        %v2201 = vpow.pop %v2200
        %v2202 = vmul.f32 %v2184, 1.442695
        %v2203 = vpow.pop %v2202
        %v2204 = vmul.f32 %v2185, 1.442695
        %v2205 = vpow.pop %v2204
        %v2206 = vmul.f32 %v2186, 1.442695
        %v2207 = vpow.pop %v2206
        %v2208 = vmul.f32 %v2187, 1.442695
        %v2209 = vpow.pop %v2208
        %v2210 = vmul.f32 %v2188, 1.442695
        %v2211 = vpow.pop %v2210
        %v2212 = vmul.f32 %v2189, 1.442695
        %v2213 = vpow.pop %v2212
        %v2214 = vmul.f32 %v2190, 1.442695
        %v2215 = vpow.pop %v2214
        %v2216 = vmul.f32 %v2191, 1.442695
        %v2217 = vpow.pop %v2216
        %v2218 = vmul.f32 %v2192, 1.442695
        %v2219 = vpow.pop %v2218
        %v2220 = vmul.f32 %v2193, 1.442695
        %v2221 = vpow.pop %v2220
        %v2222 = vmul.f32 %v2194, 1.442695
        %v2223 = vpow.pop %v2222
        %v2224 = vmul.f32 %v2195, 1.442695
        %v2225 = vpow.pop %v2224
        %v2226 = vmul.f32 %v2196, 1.442695
        %v2227 = vpow.pop %v2226
        %v2228 = vmul.f32 %v2197, 1.442695
        %v2229 = vpow.pop %v2228
        %2246 = vset.pattern.permute.xlu0 0
        %2247 = vperm.xlu0 %2246, %v2199
        %v2248 = vpop.permute.xlu0 %2247
        %2249 = vset.pattern.permute.xlu0 0
        %2250 = vperm.xlu0 %2249, %v2201
        %v2251 = vpop.permute.xlu0 %2250
        %2252 = vset.pattern.permute.xlu0 0
        %2253 = vperm.xlu0 %2252, %v2203
        %v2254 = vpop.permute.xlu0 %2253
        %2255 = vset.pattern.permute.xlu0 0
        %2256 = vperm.xlu0 %2255, %v2205
        %v2257 = vpop.permute.xlu0 %2256
        %2258 = vset.pattern.permute.xlu0 0
        %2259 = vperm.xlu0 %2258, %v2207
        %v2260 = vpop.permute.xlu0 %2259
        %2261 = vset.pattern.permute.xlu0 0
        %2262 = vperm.xlu0 %2261, %v2209
        %v2263 = vpop.permute.xlu0 %2262
        %2264 = vset.pattern.permute.xlu0 0
        %2265 = vperm.xlu0 %2264, %v2211
        %v2266 = vpop.permute.xlu0 %2265
        %2267 = vset.pattern.permute.xlu0 0
        %2268 = vperm.xlu0 %2267, %v2213
        %v2269 = vpop.permute.xlu0 %2268
        %2270 = vset.pattern.permute.xlu0 0
        %2271 = vperm.xlu0 %2270, %v2215
        %v2272 = vpop.permute.xlu0 %2271
        %2273 = vset.pattern.permute.xlu0 0
        %2274 = vperm.xlu0 %2273, %v2217
        %v2275 = vpop.permute.xlu0 %2274
        %2276 = vset.pattern.permute.xlu0 0
        %2277 = vperm.xlu0 %2276, %v2219
        %v2278 = vpop.permute.xlu0 %2277
        %2279 = vset.pattern.permute.xlu0 0
        %2280 = vperm.xlu0 %2279, %v2221
        %v2281 = vpop.permute.xlu0 %2280
        %2282 = vset.pattern.permute.xlu0 0
        %2283 = vperm.xlu0 %2282, %v2223
        %v2284 = vpop.permute.xlu0 %2283
        %2285 = vset.pattern.permute.xlu0 0
        %2286 = vperm.xlu0 %2285, %v2225
        %v2287 = vpop.permute.xlu0 %2286
        %2288 = vset.pattern.permute.xlu0 0
        %2289 = vperm.xlu0 %2288, %v2227
        %v2290 = vpop.permute.xlu0 %2289
        %2291 = vset.pattern.permute.xlu0 0
        %2292 = vperm.xlu0 %2291, %v2229
        %v2293 = vpop.permute.xlu0 %2292
        %v2294 = vlaneseq
        %v2295 = vshrl.u32 %v2294, 7
        %v2296 = vsub.s32 %v1509, %v2295
        %v2297 = vrot.slane %v2248, %v2296
        %v2298 = vlaneseq
        %v2299 = vshrl.u32 %v2298, 7
        %v2300 = vsub.s32 %v1509, %v2299
        %v2301 = vrot.slane %v2251, %v2300
        %v2302 = vlaneseq
        %v2303 = vshrl.u32 %v2302, 7
        %v2304 = vsub.s32 %v1509, %v2303
        %v2305 = vrot.slane %v2254, %v2304
        %v2306 = vlaneseq
        %v2307 = vshrl.u32 %v2306, 7
        %v2308 = vsub.s32 %v1509, %v2307
        %v2309 = vrot.slane %v2257, %v2308
        %v2310 = vlaneseq
        %v2311 = vshrl.u32 %v2310, 7
        %v2312 = vsub.s32 %v1509, %v2311
        %v2313 = vrot.slane %v2260, %v2312
        %v2314 = vlaneseq
        %v2315 = vshrl.u32 %v2314, 7
        %v2316 = vsub.s32 %v1509, %v2315
        %v2317 = vrot.slane %v2263, %v2316
        %v2318 = vlaneseq
        %v2319 = vshrl.u32 %v2318, 7
        %v2320 = vsub.s32 %v1509, %v2319
        %v2321 = vrot.slane %v2266, %v2320
        %v2322 = vlaneseq
        %v2323 = vshrl.u32 %v2322, 7
        %v2324 = vsub.s32 %v1509, %v2323
        %v2325 = vrot.slane %v2269, %v2324
        %v2326 = vlaneseq
        %v2327 = vshrl.u32 %v2326, 7
        %v2328 = vsub.s32 %v1509, %v2327
        %v2329 = vrot.slane %v2272, %v2328
        %v2330 = vlaneseq
        %v2331 = vshrl.u32 %v2330, 7
        %v2332 = vsub.s32 %v1509, %v2331
        %v2333 = vrot.slane %v2275, %v2332
        %v2334 = vlaneseq
        %v2335 = vshrl.u32 %v2334, 7
        %v2336 = vsub.s32 %v1509, %v2335
        %v2337 = vrot.slane %v2278, %v2336
        %v2338 = vlaneseq
        %v2339 = vshrl.u32 %v2338, 7
        %v2340 = vsub.s32 %v1509, %v2339
        %v2341 = vrot.slane %v2281, %v2340
        %v2342 = vlaneseq
        %v2343 = vshrl.u32 %v2342, 7
        %v2344 = vsub.s32 %v1509, %v2343
        %v2345 = vrot.slane %v2284, %v2344
        %v2346 = vlaneseq
        %v2347 = vshrl.u32 %v2346, 7
        %v2348 = vsub.s32 %v1509, %v2347
        %v2349 = vrot.slane %v2287, %v2348
        %v2350 = vlaneseq
        %v2351 = vshrl.u32 %v2350, 7
        %v2352 = vsub.s32 %v1509, %v2351
        %v2353 = vrot.slane %v2290, %v2352
        %v2354 = vlaneseq
        %v2355 = vshrl.u32 %v2354, 7
        %v2356 = vsub.s32 %v1509, %v2355
        %v2357 = vrot.slane %v2293, %v2356
        %v2358 = vsel %vm1574, %v2301, %v2297
        %v2359 = vsel %vm1576, %v2305, %v2358
        %v2360 = vsel %vm1578, %v2309, %v2359
        %v2361 = vsel %vm1580, %v2313, %v2360
        %v2362 = vsel %vm1582, %v2317, %v2361
        %v2363 = vsel %vm1584, %v2321, %v2362
        %v2364 = vsel %vm1586, %v2325, %v2363
        %v2365 = vsel %vm1574, %v2333, %v2329
        %v2366 = vsel %vm1576, %v2337, %v2365
        %v2367 = vsel %vm1578, %v2341, %v2366
        %v2368 = vsel %vm1580, %v2345, %v2367
        %v2369 = vsel %vm1582, %v2349, %v2368
        %v2370 = vsel %vm1584, %v2353, %v2369
        %v2371 = vsel %vm1586, %v2357, %v2370
        %v2374 = vsel %vm1597, %v2364, 0.0
        %2375 = vadd.xlane.f32.xlu0 %v2374
        %v2376 = vpop.xlane.xlu0 %2375
        %v2377 = vsel %vm1597, %v2371, 0.0
        %2378 = vadd.xlane.f32.xlu0 %v2377
        %v2379 = vpop.xlane.xlu0 %2378
        %v2382 = vlaneseq
        %v2383 = vshrl.u32 %v2382, 7
        %v2384 = vsub.s32 0, %v2383
        %v2385 = vrot.slane %v2376, %v2384
        %v2386 = vlaneseq
        %v2387 = vshrl.u32 %v2386, 7
        %v2388 = vsub.s32 1, %v2387
        %v2389 = vrot.slane %v2376, %v2388
        %v2390 = vlaneseq
        %v2391 = vshrl.u32 %v2390, 7
        %v2392 = vsub.s32 2, %v2391
        %v2393 = vrot.slane %v2376, %v2392
        %v2394 = vlaneseq
        %v2395 = vshrl.u32 %v2394, 7
        %v2396 = vsub.s32 3, %v2395
        %v2397 = vrot.slane %v2376, %v2396
        %v2398 = vlaneseq
        %v2399 = vshrl.u32 %v2398, 7
        %v2400 = vsub.s32 4, %v2399
        %v2401 = vrot.slane %v2376, %v2400
        %v2402 = vlaneseq
        %v2403 = vshrl.u32 %v2402, 7
        %v2404 = vsub.s32 5, %v2403
        %v2405 = vrot.slane %v2376, %v2404
        %v2406 = vlaneseq
        %v2407 = vshrl.u32 %v2406, 7
        %v2408 = vsub.s32 6, %v2407
        %v2409 = vrot.slane %v2376, %v2408
        %v2410 = vlaneseq
        %v2411 = vshrl.u32 %v2410, 7
        %v2412 = vsub.s32 7, %v2411
        %v2413 = vrot.slane %v2376, %v2412
        %v2414 = vlaneseq
        %v2415 = vshrl.u32 %v2414, 7
        %v2416 = vsub.s32 0, %v2415
        %v2417 = vrot.slane %v2379, %v2416
        %v2418 = vlaneseq
        %v2419 = vshrl.u32 %v2418, 7
        %v2420 = vsub.s32 1, %v2419
        %v2421 = vrot.slane %v2379, %v2420
        %v2422 = vlaneseq
        %v2423 = vshrl.u32 %v2422, 7
        %v2424 = vsub.s32 2, %v2423
        %v2425 = vrot.slane %v2379, %v2424
        %v2426 = vlaneseq
        %v2427 = vshrl.u32 %v2426, 7
        %v2428 = vsub.s32 3, %v2427
        %v2429 = vrot.slane %v2379, %v2428
        %v2430 = vlaneseq
        %v2431 = vshrl.u32 %v2430, 7
        %v2432 = vsub.s32 4, %v2431
        %v2433 = vrot.slane %v2379, %v2432
        %v2434 = vlaneseq
        %v2435 = vshrl.u32 %v2434, 7
        %v2436 = vsub.s32 5, %v2435
        %v2437 = vrot.slane %v2379, %v2436
        %v2438 = vlaneseq
        %v2439 = vshrl.u32 %v2438, 7
        %v2440 = vsub.s32 6, %v2439
        %v2441 = vrot.slane %v2379, %v2440
        %v2442 = vlaneseq
        %v2443 = vshrl.u32 %v2442, 7
        %v2444 = vsub.s32 7, %v2443
        %v2445 = vrot.slane %v2379, %v2444
        %v2462 = vrcp.pop %v2385
        %v2463 = vmul.f32 %v2199, %v2462
        %v2464 = vrcp.pop %v2389
        %v2465 = vmul.f32 %v2201, %v2464
        %v2466 = vrcp.pop %v2393
        %v2467 = vmul.f32 %v2203, %v2466
        %v2468 = vrcp.pop %v2397
        %v2469 = vmul.f32 %v2205, %v2468
        %v2470 = vrcp.pop %v2401
        %v2471 = vmul.f32 %v2207, %v2470
        %v2472 = vrcp.pop %v2405
        %v2473 = vmul.f32 %v2209, %v2472
        %v2474 = vrcp.pop %v2409
        %v2475 = vmul.f32 %v2211, %v2474
        %v2476 = vrcp.pop %v2413
        %v2477 = vmul.f32 %v2213, %v2476
        %v2478 = vrcp.pop %v2417
        %v2479 = vmul.f32 %v2215, %v2478
        %v2480 = vrcp.pop %v2421
        %v2481 = vmul.f32 %v2217, %v2480
        %v2482 = vrcp.pop %v2425
        %v2483 = vmul.f32 %v2219, %v2482
        %v2484 = vrcp.pop %v2429
        %v2485 = vmul.f32 %v2221, %v2484
        %v2486 = vrcp.pop %v2433
        %v2487 = vmul.f32 %v2223, %v2486
        %v2488 = vrcp.pop %v2437
        %v2489 = vmul.f32 %v2225, %v2488
        %v2490 = vrcp.pop %v2441
        %v2491 = vmul.f32 %v2227, %v2490
        %v2492 = vrcp.pop %v2445
        %v2493 = vmul.f32 %v2229, %v2492
        %2495 = vset.pattern.permute.xlu0 0
        %2496 = vperm.xlu0 %2495, %v2463
        %v2497 = vpop.permute.xlu0 %2496
        %2500 = vset.pattern.permute.xlu0 0
        %2501 = vperm.xlu0 %2500, %v2465
        %v2502 = vpop.permute.xlu0 %2501
        %2505 = vset.pattern.permute.xlu0 0
        %2506 = vperm.xlu0 %2505, %v2467
        %v2507 = vpop.permute.xlu0 %2506
        %2510 = vset.pattern.permute.xlu0 0
        %2511 = vperm.xlu0 %2510, %v2469
        %v2512 = vpop.permute.xlu0 %2511
        %2515 = vset.pattern.permute.xlu0 0
        %2516 = vperm.xlu0 %2515, %v2471
        %v2517 = vpop.permute.xlu0 %2516
        %2520 = vset.pattern.permute.xlu0 0
        %2521 = vperm.xlu0 %2520, %v2473
        %v2522 = vpop.permute.xlu0 %2521
        %2525 = vset.pattern.permute.xlu0 0
        %2526 = vperm.xlu0 %2525, %v2475
        %v2527 = vpop.permute.xlu0 %2526
        %2530 = vset.pattern.permute.xlu0 0
        %2531 = vperm.xlu0 %2530, %v2477
        %v2532 = vpop.permute.xlu0 %2531
        %2535 = vset.pattern.permute.xlu0 0
        %2536 = vperm.xlu0 %2535, %v2479
        %v2537 = vpop.permute.xlu0 %2536
        %2540 = vset.pattern.permute.xlu0 0
        %2541 = vperm.xlu0 %2540, %v2481
        %v2542 = vpop.permute.xlu0 %2541
        %2545 = vset.pattern.permute.xlu0 0
        %2546 = vperm.xlu0 %2545, %v2483
        %v2547 = vpop.permute.xlu0 %2546
        %2550 = vset.pattern.permute.xlu0 0
        %2551 = vperm.xlu0 %2550, %v2485
        %v2552 = vpop.permute.xlu0 %2551
        %2555 = vset.pattern.permute.xlu0 0
        %2556 = vperm.xlu0 %2555, %v2487
        %v2557 = vpop.permute.xlu0 %2556
        %2560 = vset.pattern.permute.xlu0 0
        %2561 = vperm.xlu0 %2560, %v2489
        %v2562 = vpop.permute.xlu0 %2561
        %2565 = vset.pattern.permute.xlu0 0
        %2566 = vperm.xlu0 %2565, %v2491
        %v2567 = vpop.permute.xlu0 %2566
        %2570 = vset.pattern.permute.xlu0 0
        %2571 = vperm.xlu0 %2570, %v2493
        %v2572 = vpop.permute.xlu0 %2571
        %v2574 = vmul.f32 %v2497, %v531
        %v2575 = vmul.f32 %v2502, %v532
        %v2576 = vmul.f32 %v2507, %v533
        %v2577 = vmul.f32 %v2512, %v534
        %v2578 = vmul.f32 %v2517, %v535
        %v2579 = vmul.f32 %v2522, %v536
        %v2580 = vmul.f32 %v2527, %v537
        %v2581 = vmul.f32 %v2532, %v538
        %v2582 = vmul.f32 %v2537, %v539
        %v2583 = vmul.f32 %v2542, %v540
        %v2584 = vmul.f32 %v2547, %v541
        %v2585 = vmul.f32 %v2552, %v542
        %v2586 = vmul.f32 %v2557, %v543
        %v2587 = vmul.f32 %v2562, %v544
        %v2588 = vmul.f32 %v2567, %v545
        %v2589 = vmul.f32 %v2572, %v546
        %v2590 = vsel %vm409, %v2574, 0.0
        %v2591 = vrot.slane %v2590, 4
        %v2592 = vadd.f32 %v2590, %v2591
        %v2593 = vrot.slane %v2592, 2
        %v2594 = vadd.f32 %v2592, %v2593
        %v2595 = vrot.slane %v2594, 1
        %v2596 = vadd.f32 %v2594, %v2595
        %v2597 = vsel %vm409, %v2575, 0.0
        %v2598 = vrot.slane %v2597, 4
        %v2599 = vadd.f32 %v2597, %v2598
        %v2600 = vrot.slane %v2599, 2
        %v2601 = vadd.f32 %v2599, %v2600
        %v2602 = vrot.slane %v2601, 1
        %v2603 = vadd.f32 %v2601, %v2602
        %v2604 = vsel %vm409, %v2576, 0.0
        %v2605 = vrot.slane %v2604, 4
        %v2606 = vadd.f32 %v2604, %v2605
        %v2607 = vrot.slane %v2606, 2
        %v2608 = vadd.f32 %v2606, %v2607
        %v2609 = vrot.slane %v2608, 1
        %v2610 = vadd.f32 %v2608, %v2609
        %v2611 = vsel %vm409, %v2577, 0.0
        %v2612 = vrot.slane %v2611, 4
        %v2613 = vadd.f32 %v2611, %v2612
        %v2614 = vrot.slane %v2613, 2
        %v2615 = vadd.f32 %v2613, %v2614
        %v2616 = vrot.slane %v2615, 1
        %v2617 = vadd.f32 %v2615, %v2616
        %v2618 = vsel %vm409, %v2578, 0.0
        %v2619 = vrot.slane %v2618, 4
        %v2620 = vadd.f32 %v2618, %v2619
        %v2621 = vrot.slane %v2620, 2
        %v2622 = vadd.f32 %v2620, %v2621
        %v2623 = vrot.slane %v2622, 1
        %v2624 = vadd.f32 %v2622, %v2623
        %v2625 = vsel %vm409, %v2579, 0.0
        %v2626 = vrot.slane %v2625, 4
        %v2627 = vadd.f32 %v2625, %v2626
        %v2628 = vrot.slane %v2627, 2
        %v2629 = vadd.f32 %v2627, %v2628
        %v2630 = vrot.slane %v2629, 1
        %v2631 = vadd.f32 %v2629, %v2630
        %v2632 = vsel %vm409, %v2580, 0.0
        %v2633 = vrot.slane %v2632, 4
        %v2634 = vadd.f32 %v2632, %v2633
        %v2635 = vrot.slane %v2634, 2
        %v2636 = vadd.f32 %v2634, %v2635
        %v2637 = vrot.slane %v2636, 1
        %v2638 = vadd.f32 %v2636, %v2637
        %v2639 = vsel %vm409, %v2581, 0.0
        %v2640 = vrot.slane %v2639, 4
        %v2641 = vadd.f32 %v2639, %v2640
        %v2642 = vrot.slane %v2641, 2
        %v2643 = vadd.f32 %v2641, %v2642
        %v2644 = vrot.slane %v2643, 1
        %v2645 = vadd.f32 %v2643, %v2644
        %v2646 = vsel %vm409, %v2582, 0.0
        %v2647 = vrot.slane %v2646, 4
        %v2648 = vadd.f32 %v2646, %v2647
        %v2649 = vrot.slane %v2648, 2
        %v2650 = vadd.f32 %v2648, %v2649
        %v2651 = vrot.slane %v2650, 1
        %v2652 = vadd.f32 %v2650, %v2651
        %v2653 = vsel %vm409, %v2583, 0.0
        %v2654 = vrot.slane %v2653, 4
        %v2655 = vadd.f32 %v2653, %v2654
        %v2656 = vrot.slane %v2655, 2
        %v2657 = vadd.f32 %v2655, %v2656
        %v2658 = vrot.slane %v2657, 1
        %v2659 = vadd.f32 %v2657, %v2658
        %v2660 = vsel %vm409, %v2584, 0.0
        %v2661 = vrot.slane %v2660, 4
        %v2662 = vadd.f32 %v2660, %v2661
        %v2663 = vrot.slane %v2662, 2
        %v2664 = vadd.f32 %v2662, %v2663
        %v2665 = vrot.slane %v2664, 1
        %v2666 = vadd.f32 %v2664, %v2665
        %v2667 = vsel %vm409, %v2585, 0.0
        %v2668 = vrot.slane %v2667, 4
        %v2669 = vadd.f32 %v2667, %v2668
        %v2670 = vrot.slane %v2669, 2
        %v2671 = vadd.f32 %v2669, %v2670
        %v2672 = vrot.slane %v2671, 1
        %v2673 = vadd.f32 %v2671, %v2672
        %v2674 = vsel %vm409, %v2586, 0.0
        %v2675 = vrot.slane %v2674, 4
        %v2676 = vadd.f32 %v2674, %v2675
        %v2677 = vrot.slane %v2676, 2
        %v2678 = vadd.f32 %v2676, %v2677
        %v2679 = vrot.slane %v2678, 1
        %v2680 = vadd.f32 %v2678, %v2679
        %v2681 = vsel %vm409, %v2587, 0.0
        %v2682 = vrot.slane %v2681, 4
        %v2683 = vadd.f32 %v2681, %v2682
        %v2684 = vrot.slane %v2683, 2
        %v2685 = vadd.f32 %v2683, %v2684
        %v2686 = vrot.slane %v2685, 1
        %v2687 = vadd.f32 %v2685, %v2686
        %v2688 = vsel %vm409, %v2588, 0.0
        %v2689 = vrot.slane %v2688, 4
        %v2690 = vadd.f32 %v2688, %v2689
        %v2691 = vrot.slane %v2690, 2
        %v2692 = vadd.f32 %v2690, %v2691
        %v2693 = vrot.slane %v2692, 1
        %v2694 = vadd.f32 %v2692, %v2693
        %v2695 = vsel %vm409, %v2589, 0.0
        %v2696 = vrot.slane %v2695, 4
        %v2697 = vadd.f32 %v2695, %v2696
        %v2698 = vrot.slane %v2697, 2
        %v2699 = vadd.f32 %v2697, %v2698
        %v2700 = vrot.slane %v2699, 1
        %v2701 = vadd.f32 %v2699, %v2700
        %2703 = vset.pattern.permute.xlu0 0
        %2704 = vperm.xlu0 %2703, %v1967
        %v2705 = vpop.permute.xlu0 %2704
        %2708 = vset.pattern.permute.xlu0 0
        %2709 = vperm.xlu0 %2708, %v1969
        %v2710 = vpop.permute.xlu0 %2709
        %2713 = vset.pattern.permute.xlu0 0
        %2714 = vperm.xlu0 %2713, %v1971
        %v2715 = vpop.permute.xlu0 %2714
        %2718 = vset.pattern.permute.xlu0 0
        %2719 = vperm.xlu0 %2718, %v1973
        %v2720 = vpop.permute.xlu0 %2719
        %2723 = vset.pattern.permute.xlu0 0
        %2724 = vperm.xlu0 %2723, %v1975
        %v2725 = vpop.permute.xlu0 %2724
        %2728 = vset.pattern.permute.xlu0 0
        %2729 = vperm.xlu0 %2728, %v1977
        %v2730 = vpop.permute.xlu0 %2729
        %2733 = vset.pattern.permute.xlu0 0
        %2734 = vperm.xlu0 %2733, %v1979
        %v2735 = vpop.permute.xlu0 %2734
        %2738 = vset.pattern.permute.xlu0 0
        %2739 = vperm.xlu0 %2738, %v1981
        %v2740 = vpop.permute.xlu0 %2739
        %2743 = vset.pattern.permute.xlu0 0
        %2744 = vperm.xlu0 %2743, %v1983
        %v2745 = vpop.permute.xlu0 %2744
        %2748 = vset.pattern.permute.xlu0 0
        %2749 = vperm.xlu0 %2748, %v1985
        %v2750 = vpop.permute.xlu0 %2749
        %2753 = vset.pattern.permute.xlu0 0
        %2754 = vperm.xlu0 %2753, %v1987
        %v2755 = vpop.permute.xlu0 %2754
        %2758 = vset.pattern.permute.xlu0 0
        %2759 = vperm.xlu0 %2758, %v1989
        %v2760 = vpop.permute.xlu0 %2759
        %2763 = vset.pattern.permute.xlu0 0
        %2764 = vperm.xlu0 %2763, %v1991
        %v2765 = vpop.permute.xlu0 %2764
        %2768 = vset.pattern.permute.xlu0 0
        %2769 = vperm.xlu0 %2768, %v1993
        %v2770 = vpop.permute.xlu0 %2769
        %2773 = vset.pattern.permute.xlu0 0
        %2774 = vperm.xlu0 %2773, %v1995
        %v2775 = vpop.permute.xlu0 %2774
        %2778 = vset.pattern.permute.xlu0 0
        %2779 = vperm.xlu0 %2778, %v1997
        %v2780 = vpop.permute.xlu0 %2779
        %v2782 = vmul.f32 %v2705, %v747
        %v2783 = vmul.f32 %v2710, %v748
        %v2784 = vmul.f32 %v2715, %v749
        %v2785 = vmul.f32 %v2720, %v750
        %v2786 = vmul.f32 %v2725, %v751
        %v2787 = vmul.f32 %v2730, %v752
        %v2788 = vmul.f32 %v2735, %v753
        %v2789 = vmul.f32 %v2740, %v754
        %v2790 = vmul.f32 %v2745, %v755
        %v2791 = vmul.f32 %v2750, %v756
        %v2792 = vmul.f32 %v2755, %v757
        %v2793 = vmul.f32 %v2760, %v758
        %v2794 = vmul.f32 %v2765, %v759
        %v2795 = vmul.f32 %v2770, %v760
        %v2796 = vmul.f32 %v2775, %v761
        %v2797 = vmul.f32 %v2780, %v762
        %v2798 = vsel %vm409, %v2782, 0.0
        %v2799 = vrot.slane %v2798, 4
        %v2800 = vadd.f32 %v2798, %v2799
        %v2801 = vrot.slane %v2800, 2
        %v2802 = vadd.f32 %v2800, %v2801
        %v2803 = vrot.slane %v2802, 1
        %v2804 = vadd.f32 %v2802, %v2803
        %v2805 = vsel %vm409, %v2783, 0.0
        %v2806 = vrot.slane %v2805, 4
        %v2807 = vadd.f32 %v2805, %v2806
        %v2808 = vrot.slane %v2807, 2
        %v2809 = vadd.f32 %v2807, %v2808
        %v2810 = vrot.slane %v2809, 1
        %v2811 = vadd.f32 %v2809, %v2810
        %v2812 = vsel %vm409, %v2784, 0.0
        %v2813 = vrot.slane %v2812, 4
        %v2814 = vadd.f32 %v2812, %v2813
        %v2815 = vrot.slane %v2814, 2
        %v2816 = vadd.f32 %v2814, %v2815
        %v2817 = vrot.slane %v2816, 1
        %v2818 = vadd.f32 %v2816, %v2817
        %v2819 = vsel %vm409, %v2785, 0.0
        %v2820 = vrot.slane %v2819, 4
        %v2821 = vadd.f32 %v2819, %v2820
        %v2822 = vrot.slane %v2821, 2
        %v2823 = vadd.f32 %v2821, %v2822
        %v2824 = vrot.slane %v2823, 1
        %v2825 = vadd.f32 %v2823, %v2824
        %v2826 = vsel %vm409, %v2786, 0.0
        %v2827 = vrot.slane %v2826, 4
        %v2828 = vadd.f32 %v2826, %v2827
        %v2829 = vrot.slane %v2828, 2
        %v2830 = vadd.f32 %v2828, %v2829
        %v2831 = vrot.slane %v2830, 1
        %v2832 = vadd.f32 %v2830, %v2831
        %v2833 = vsel %vm409, %v2787, 0.0
        %v2834 = vrot.slane %v2833, 4
        %v2835 = vadd.f32 %v2833, %v2834
        %v2836 = vrot.slane %v2835, 2
        %v2837 = vadd.f32 %v2835, %v2836
        %v2838 = vrot.slane %v2837, 1
        %v2839 = vadd.f32 %v2837, %v2838
        %v2840 = vsel %vm409, %v2788, 0.0
        %v2841 = vrot.slane %v2840, 4
        %v2842 = vadd.f32 %v2840, %v2841
        %v2843 = vrot.slane %v2842, 2
        %v2844 = vadd.f32 %v2842, %v2843
        %v2845 = vrot.slane %v2844, 1
        %v2846 = vadd.f32 %v2844, %v2845
        %v2847 = vsel %vm409, %v2789, 0.0
        %v2848 = vrot.slane %v2847, 4
        %v2849 = vadd.f32 %v2847, %v2848
        %v2850 = vrot.slane %v2849, 2
        %v2851 = vadd.f32 %v2849, %v2850
        %v2852 = vrot.slane %v2851, 1
        %v2853 = vadd.f32 %v2851, %v2852
        %v2854 = vsel %vm409, %v2790, 0.0
        %v2855 = vrot.slane %v2854, 4
        %v2856 = vadd.f32 %v2854, %v2855
        %v2857 = vrot.slane %v2856, 2
        %v2858 = vadd.f32 %v2856, %v2857
        %v2859 = vrot.slane %v2858, 1
        %v2860 = vadd.f32 %v2858, %v2859
        %v2861 = vsel %vm409, %v2791, 0.0
        %v2862 = vrot.slane %v2861, 4
        %v2863 = vadd.f32 %v2861, %v2862
        %v2864 = vrot.slane %v2863, 2
        %v2865 = vadd.f32 %v2863, %v2864
        %v2866 = vrot.slane %v2865, 1
        %v2867 = vadd.f32 %v2865, %v2866
        %v2868 = vsel %vm409, %v2792, 0.0
        %v2869 = vrot.slane %v2868, 4
        %v2870 = vadd.f32 %v2868, %v2869
        %v2871 = vrot.slane %v2870, 2
        %v2872 = vadd.f32 %v2870, %v2871
        %v2873 = vrot.slane %v2872, 1
        %v2874 = vadd.f32 %v2872, %v2873
        %v2875 = vsel %vm409, %v2793, 0.0
        %v2876 = vrot.slane %v2875, 4
        %v2877 = vadd.f32 %v2875, %v2876
        %v2878 = vrot.slane %v2877, 2
        %v2879 = vadd.f32 %v2877, %v2878
        %v2880 = vrot.slane %v2879, 1
        %v2881 = vadd.f32 %v2879, %v2880
        %v2882 = vsel %vm409, %v2794, 0.0
        %v2883 = vrot.slane %v2882, 4
        %v2884 = vadd.f32 %v2882, %v2883
        %v2885 = vrot.slane %v2884, 2
        %v2886 = vadd.f32 %v2884, %v2885
        %v2887 = vrot.slane %v2886, 1
        %v2888 = vadd.f32 %v2886, %v2887
        %v2889 = vsel %vm409, %v2795, 0.0
        %v2890 = vrot.slane %v2889, 4
        %v2891 = vadd.f32 %v2889, %v2890
        %v2892 = vrot.slane %v2891, 2
        %v2893 = vadd.f32 %v2891, %v2892
        %v2894 = vrot.slane %v2893, 1
        %v2895 = vadd.f32 %v2893, %v2894
        %v2896 = vsel %vm409, %v2796, 0.0
        %v2897 = vrot.slane %v2896, 4
        %v2898 = vadd.f32 %v2896, %v2897
        %v2899 = vrot.slane %v2898, 2
        %v2900 = vadd.f32 %v2898, %v2899
        %v2901 = vrot.slane %v2900, 1
        %v2902 = vadd.f32 %v2900, %v2901
        %v2903 = vsel %vm409, %v2797, 0.0
        %v2904 = vrot.slane %v2903, 4
        %v2905 = vadd.f32 %v2903, %v2904
        %v2906 = vrot.slane %v2905, 2
        %v2907 = vadd.f32 %v2905, %v2906
        %v2908 = vrot.slane %v2907, 1
        %v2909 = vadd.f32 %v2907, %v2908
        %v2926 = vsel %vm1574, %v2603, %v2596
        %v2927 = vsel %vm1576, %v2610, %v2926
        %v2928 = vsel %vm1578, %v2617, %v2927
        %v2929 = vsel %vm1580, %v2624, %v2928
        %v2930 = vsel %vm1582, %v2631, %v2929
        %v2931 = vsel %vm1584, %v2638, %v2930
        %v2932 = vsel %vm1586, %v2645, %v2931
        %v2933 = vsel %vm1574, %v2659, %v2652
        %v2934 = vsel %vm1576, %v2666, %v2933
        %v2935 = vsel %vm1578, %v2673, %v2934
        %v2936 = vsel %vm1580, %v2680, %v2935
        %v2937 = vsel %vm1582, %v2687, %v2936
        %v2938 = vsel %vm1584, %v2694, %v2937
        %v2939 = vsel %vm1586, %v2701, %v2938
        %2942 = vst.msk [vmem:[%s315] sm:$0xff] %vm409, %v2932
        %2943 = vst.msk [vmem:[%s315 + $0x8] sm:$0xff] %vm409, %v2939
        %v2960 = vsel %vm1574, %v2811, %v2804
        %v2961 = vsel %vm1576, %v2818, %v2960
        %v2962 = vsel %vm1578, %v2825, %v2961
        %v2963 = vsel %vm1580, %v2832, %v2962
        %v2964 = vsel %vm1582, %v2839, %v2963
        %v2965 = vsel %vm1584, %v2846, %v2964
        %v2966 = vsel %vm1586, %v2853, %v2965
        %v2967 = vsel %vm1574, %v2867, %v2860
        %v2968 = vsel %vm1576, %v2874, %v2967
        %v2969 = vsel %vm1578, %v2881, %v2968
        %v2970 = vsel %vm1580, %v2888, %v2969
        %v2971 = vsel %vm1582, %v2895, %v2970
        %v2972 = vsel %vm1584, %v2902, %v2971
        %v2973 = vsel %vm1586, %v2909, %v2972
        %2974 = vrot.lane.b32.xlu0 %v2966, 32
        %v2975 = vpop.permute.xlu0 %2974
        %2976 = vrot.lane.b32.xlu0 %v2973, 32
        %v2977 = vpop.permute.xlu0 %2976
        %vm2980 = vcmask 523520
        %2981 = vst.msk [vmem:[%s315] sm:$0xff] %vm2980, %v2975
        %2982 = vst.msk [vmem:[%s315 + $0x8] sm:$0xff] %vm2980, %v2977
        %v2983 = vadd.s32 %v1509, 4294967232
        %v2984 = vlaneseq
        %v2985 = vshrl.u32 %v2984, 7
        %v2986 = vsub.s32 %v2983, %v2985
        %v2987 = vrot.slane %v2497, %v2986
        %v2988 = vlaneseq
        %v2989 = vshrl.u32 %v2988, 7
        %v2990 = vsub.s32 %v2983, %v2989
        %v2991 = vrot.slane %v2502, %v2990
        %v2992 = vlaneseq
        %v2993 = vshrl.u32 %v2992, 7
        %v2994 = vsub.s32 %v2983, %v2993
        %v2995 = vrot.slane %v2507, %v2994
        %v2996 = vlaneseq
        %v2997 = vshrl.u32 %v2996, 7
        %v2998 = vsub.s32 %v2983, %v2997
        %v2999 = vrot.slane %v2512, %v2998
        %v3000 = vlaneseq
        %v3001 = vshrl.u32 %v3000, 7
        %v3002 = vsub.s32 %v2983, %v3001
        %v3003 = vrot.slane %v2517, %v3002
        %v3004 = vlaneseq
        %v3005 = vshrl.u32 %v3004, 7
        %v3006 = vsub.s32 %v2983, %v3005
        %v3007 = vrot.slane %v2522, %v3006
        %v3008 = vlaneseq
        %v3009 = vshrl.u32 %v3008, 7
        %v3010 = vsub.s32 %v2983, %v3009
        %v3011 = vrot.slane %v2527, %v3010
        %v3012 = vlaneseq
        %v3013 = vshrl.u32 %v3012, 7
        %v3014 = vsub.s32 %v2983, %v3013
        %v3015 = vrot.slane %v2532, %v3014
        %v3016 = vlaneseq
        %v3017 = vshrl.u32 %v3016, 7
        %v3018 = vsub.s32 %v2983, %v3017
        %v3019 = vrot.slane %v2537, %v3018
        %v3020 = vlaneseq
        %v3021 = vshrl.u32 %v3020, 7
        %v3022 = vsub.s32 %v2983, %v3021
        %v3023 = vrot.slane %v2542, %v3022
        %v3024 = vlaneseq
        %v3025 = vshrl.u32 %v3024, 7
        %v3026 = vsub.s32 %v2983, %v3025
        %v3027 = vrot.slane %v2547, %v3026
        %v3028 = vlaneseq
        %v3029 = vshrl.u32 %v3028, 7
        %v3030 = vsub.s32 %v2983, %v3029
        %v3031 = vrot.slane %v2552, %v3030
        %v3032 = vlaneseq
        %v3033 = vshrl.u32 %v3032, 7
        %v3034 = vsub.s32 %v2983, %v3033
        %v3035 = vrot.slane %v2557, %v3034
        %v3036 = vlaneseq
        %v3037 = vshrl.u32 %v3036, 7
        %v3038 = vsub.s32 %v2983, %v3037
        %v3039 = vrot.slane %v2562, %v3038
        %v3040 = vlaneseq
        %v3041 = vshrl.u32 %v3040, 7
        %v3042 = vsub.s32 %v2983, %v3041
        %v3043 = vrot.slane %v2567, %v3042
        %v3044 = vlaneseq
        %v3045 = vshrl.u32 %v3044, 7
        %v3046 = vsub.s32 %v2983, %v3045
        %v3047 = vrot.slane %v2572, %v3046
        %v3048 = vsel %vm1574, %v2991, %v2987
        %v3049 = vsel %vm1576, %v2995, %v3048
        %v3050 = vsel %vm1578, %v2999, %v3049
        %v3051 = vsel %vm1580, %v3003, %v3050
        %v3052 = vsel %vm1582, %v3007, %v3051
        %v3053 = vsel %vm1584, %v3011, %v3052
        %v3054 = vsel %vm1586, %v3015, %v3053
        %v3055 = vsel %vm1574, %v3023, %v3019
        %v3056 = vsel %vm1576, %v3027, %v3055
        %v3057 = vsel %vm1578, %v3031, %v3056
        %v3058 = vsel %vm1580, %v3035, %v3057
        %v3059 = vsel %vm1582, %v3039, %v3058
        %v3060 = vsel %vm1584, %v3043, %v3059
        %v3061 = vsel %vm1586, %v3047, %v3060
        %vm3064 = vcmask 589312
        %3065 = vst.msk [vmem:[%s315] sm:$0xff] %vm3064, %v3054
        %3066 = vst.msk [vmem:[%s315 + $0x8] sm:$0xff] %vm3064, %v3061
        %v3067 = vadd.s32 %v1509, 4294967224
        %v3068 = vlaneseq
        %v3069 = vshrl.u32 %v3068, 7
        %v3070 = vsub.s32 %v3067, %v3069
        %v3071 = vrot.slane %v2705, %v3070
        %v3072 = vlaneseq
        %v3073 = vshrl.u32 %v3072, 7
        %v3074 = vsub.s32 %v3067, %v3073
        %v3075 = vrot.slane %v2710, %v3074
        %v3076 = vlaneseq
        %v3077 = vshrl.u32 %v3076, 7
        %v3078 = vsub.s32 %v3067, %v3077
        %v3079 = vrot.slane %v2715, %v3078
        %v3080 = vlaneseq
        %v3081 = vshrl.u32 %v3080, 7
        %v3082 = vsub.s32 %v3067, %v3081
        %v3083 = vrot.slane %v2720, %v3082
        %v3084 = vlaneseq
        %v3085 = vshrl.u32 %v3084, 7
        %v3086 = vsub.s32 %v3067, %v3085
        %v3087 = vrot.slane %v2725, %v3086
        %v3088 = vlaneseq
        %v3089 = vshrl.u32 %v3088, 7
        %v3090 = vsub.s32 %v3067, %v3089
        %v3091 = vrot.slane %v2730, %v3090
        %v3092 = vlaneseq
        %v3093 = vshrl.u32 %v3092, 7
        %v3094 = vsub.s32 %v3067, %v3093
        %v3095 = vrot.slane %v2735, %v3094
        %v3096 = vlaneseq
        %v3097 = vshrl.u32 %v3096, 7
        %v3098 = vsub.s32 %v3067, %v3097
        %v3099 = vrot.slane %v2740, %v3098
        %v3100 = vlaneseq
        %v3101 = vshrl.u32 %v3100, 7
        %v3102 = vsub.s32 %v3067, %v3101
        %v3103 = vrot.slane %v2745, %v3102
        %v3104 = vlaneseq
        %v3105 = vshrl.u32 %v3104, 7
        %v3106 = vsub.s32 %v3067, %v3105
        %v3107 = vrot.slane %v2750, %v3106
        %v3108 = vlaneseq
        %v3109 = vshrl.u32 %v3108, 7
        %v3110 = vsub.s32 %v3067, %v3109
        %v3111 = vrot.slane %v2755, %v3110
        %v3112 = vlaneseq
        %v3113 = vshrl.u32 %v3112, 7
        %v3114 = vsub.s32 %v3067, %v3113
        %v3115 = vrot.slane %v2760, %v3114
        %v3116 = vlaneseq
        %v3117 = vshrl.u32 %v3116, 7
        %v3118 = vsub.s32 %v3067, %v3117
        %v3119 = vrot.slane %v2765, %v3118
        %v3120 = vlaneseq
        %v3121 = vshrl.u32 %v3120, 7
        %v3122 = vsub.s32 %v3067, %v3121
        %v3123 = vrot.slane %v2770, %v3122
        %v3124 = vlaneseq
        %v3125 = vshrl.u32 %v3124, 7
        %v3126 = vsub.s32 %v3067, %v3125
        %v3127 = vrot.slane %v2775, %v3126
        %v3128 = vlaneseq
        %v3129 = vshrl.u32 %v3128, 7
        %v3130 = vsub.s32 %v3067, %v3129
        %v3131 = vrot.slane %v2780, %v3130
        %v3132 = vsel %vm1574, %v3075, %v3071
        %v3133 = vsel %vm1576, %v3079, %v3132
        %v3134 = vsel %vm1578, %v3083, %v3133
        %v3135 = vsel %vm1580, %v3087, %v3134
        %v3136 = vsel %vm1582, %v3091, %v3135
        %v3137 = vsel %vm1584, %v3095, %v3136
        %v3138 = vsel %vm1586, %v3099, %v3137
        %v3139 = vsel %vm1574, %v3107, %v3103
        %v3140 = vsel %vm1576, %v3111, %v3139
        %v3141 = vsel %vm1578, %v3115, %v3140
        %v3142 = vsel %vm1580, %v3119, %v3141
        %v3143 = vsel %vm1582, %v3123, %v3142
        %v3144 = vsel %vm1584, %v3127, %v3143
        %v3145 = vsel %vm1586, %v3131, %v3144
        %vm3148 = vcmask 654912
        %3149 = vst.msk [vmem:[%s315] sm:$0xff] %vm3148, %v3138
        %3150 = vst.msk [vmem:[%s315 + $0x8] sm:$0xff] %vm3148, %v3145
        %vm3151 = vcmask 1048192
        %3152 = vst.msk [vmem:[%s315] sm:$0xff] %vm3151, 0.0
        %3153 = vst.msk [vmem:[%s315 + $0x8] sm:$0xff] %vm3151, 0.0
        %s3154 = sand.u32 %s208, 1
        %s3155 = scalar_lea.sflag [#allocation3], %s3154
        %s3156 = sand.u32 %s208, 1
        %s3157 = smul.addr %s3156, 16
        %s3158 = scalar_lea.vmem [#allocation2], %s3157
        // Predicated region
        $region53: #{tpu_custom_call.1} parent=51 // pred_check
          %p3159 = pneg %p218
        $region54: #{tpu_custom_call.1} parent=51 // pred_check_branch
          %3161 = sbr.rel (%p3159) target = $region56
        $region55: #{tpu_custom_call.1} parent=51 // pred_region
          %s3162 = smul.u32 2, %s22
          %s3164 = ssub.s32 256, 256
          %3165 = vsyncadd %s3155, %s3164
          %s3166 = smul.addr %s3162, 128
          %s3167 = scalar_lea.hbm %s8, %s3166
          %s3168 = sshll.u32 %s3158, 4
          %s3169 = int_to_ptr.vmem [resolvable:$true] %s3168
          %3174 = dma.vmem_to_hbm [thread:$0]  %s3169, 256, %s3167, %s3155, 128, 128, 8
        $region56: #{tpu_custom_call.1} parent=51 // pred_fallthru
          _
      $region52: #{tpu_custom_call.1} parent=5 // pred_fallthru
        _
      %p3175 = scmp.le.s32.totalorder 2, %s17
      // Predicated region
      $region57: #{tpu_custom_call.1} parent=5 // pred_check
        %p3176 = pneg %p3175
      $region58: #{tpu_custom_call.1} parent=5 // pred_check_branch
        %3178 = sbr.rel (%p3176) target = $region60
      $region59: #{tpu_custom_call.1} parent=5 // pred_region
        %s3179 = ssub.s32 %s17, 2
        // Predicated region
        $region61: #{tpu_custom_call.1} parent=59 // pred_check
          %p3180 = pneg %p224
        $region62: #{tpu_custom_call.1} parent=59 // pred_check_branch
          %3182 = sbr.rel (%p3180) target = $region64
        $region63: #{tpu_custom_call.1} parent=59 // pred_region
          %s3183 = sand.u32 %s209, 1
          %s3184 = scalar_lea.sflag [#allocation3], %s3183
          %s3185 = sand.u32 %s209, 1
          %s3186 = smul.addr %s3185, 16
          %s3187 = scalar_lea.vmem [#allocation2], %s3186
          %3188 = dma.done %s3184, 256
        $region64: #{tpu_custom_call.1} parent=59 // pred_fallthru
          _
      $region60: #{tpu_custom_call.1} parent=5 // pred_fallthru
        _
    $region6: #{tpu_custom_call.1} parent=1 // loop_footer
      %s21 = sadd.s32 1, %s17
    $region7: #{tpu_custom_call.1} parent=1 // loop_footer_branch
      %16 = sbr.rel target = $region3
    $region8: #{tpu_custom_call.1} parent=1 // loop_exit
      _
    %3189 = vsyncpa [#allocation3], 1
    %s3190 = scalar_lea.sflag [#allocation3], 1
    %3191 = vsyncpa %s3190, 1

</llo_original>
